<compile_context>
chip_gen: v7x
topology: tpu7x:2x2x1
jax: 0.10.0
libtpu: 0.0.40
codegen_flags: <defaults>
</compile_context>

<pallas_src>
from functools import partial

import jax
import jax.numpy as jnp
from jax.experimental import pallas as pl
from jax.experimental.pallas import tpu as pltpu


def _loss_and_found_kernel(alpha, w_ref, h_ref, k_ref, out_ref):
    # Tiles are (D, TN); reduce over the sublane (D) axis.
    w = w_ref[...].astype(jnp.float32)
    h = h_ref[...].astype(jnp.float32)
    k = k_ref[...].astype(jnp.float32)

    dh = w - h
    dk = w - k

    hit_loss = jnp.sqrt(jnp.sum(dh * dh, axis=0, keepdims=True))    # (1, TN)
    kill_loss = jnp.sqrt(jnp.sum(dk * dk, axis=0, keepdims=True))   # (1, TN)
    final_loss = jnp.maximum(0.0, hit_loss - kill_loss + alpha)     # (1, TN)

    # Single unmasked (3, TN) store: row 0 = final, row 1 = hit, row 2 = kill.
    out_ref[...] = jnp.concatenate([final_loss, hit_loss, kill_loss], axis=0)


def _reference(w, h, k, alpha):
    hit = jnp.linalg.norm(w - h, axis=0)
    kill = jnp.linalg.norm(w - k, axis=0)
    final = jnp.maximum(0.0, hit - kill + alpha)
    return final, hit, kill


def loss_and_found(wait_list, hit_list, kill_list, alpha=0.5):
    assert wait_list.shape == hit_list.shape == kill_list.shape, (
        f"Expected all inputs to be of the same shape: "
        f"{wait_list.shape}, {hit_list.shape} and {kill_list.shape}")

    # Glue: squeeze leading axis (matches torch .squeeze(0)).
    w = jnp.squeeze(wait_list, axis=0)
    h = jnp.squeeze(hit_list, axis=0)
    k = jnp.squeeze(kill_list, axis=0)
    D, N = w.shape
    alpha = float(alpha)
    itemsize = jnp.dtype(w.dtype).itemsize

    # Tiny problem (< 2 MiB of total input): pallas_call launch + pipeline
    # prolog/epilog dominate; let XLA fuse the plain-JAX expression.
    if 3 * D * N * itemsize < (2 << 20):
        return _reference(w.astype(jnp.float32), h.astype(jnp.float32),
                          k.astype(jnp.float32), alpha)

    # ---- Tile-size selection -------------------------------------------------
    # Double-buffered per-lane VMEM bytes: 3 inputs * D * itemsize + 3 f32
    # output rows, all x2 buffers.  Budget ~20 MiB, with vmem_limit_bytes set
    # to 28 MiB — under v7x's 32 MiB scoped default / 64 MiB physical, and
    # raised explicitly above v5e's 16 MiB scoped default.
    per_lane_db = 2 * (3 * D * itemsize + 3 * 4)
    budget_bytes = 20 << 20
    vmem_limit_bytes = 28 << 20
    tn_budget = (budget_bytes // per_lane_db) // 128 * 128
    if tn_budget < 128:
        # Even a 128-lane tile would blow the VMEM budget (very large D).
        # TODO(synk): D-chunked grid ("arbitrary" axis + sq-sum accumulator).
        return _reference(w.astype(jnp.float32), h.astype(jnp.float32),
                          k.astype(jnp.float32), alpha)

    n128 = pl.cdiv(N, 128) * 128
    # Aim for >= 4 grid steps (megacore sharding on v7x + pipeline warm-up
    # amortisation) ...
    tn_steps = pl.cdiv(pl.cdiv(n128, 4), 128) * 128
    # ... but never shrink below ~1 MiB of input DMA per step (or 512 lanes).
    tn_floor = max(512, pl.cdiv(1 << 20, 3 * D * itemsize))
    tn_floor = pl.cdiv(tn_floor, 128) * 128
    tn = min(int(tn_budget), max(int(tn_steps), int(tn_floor)))
    tn = max(128, min(tn, int(n128)))

    # No pad-to-TN: Pallas clips the boundary block's DMAs; garbage lanes only
    # reach output columns >= N, which the [:, :N] slice below discards.
    grid = (pl.cdiv(N, tn),)
    in_spec = pl.BlockSpec((D, tn), lambda i: (0, i))
    out_spec = pl.BlockSpec((3, tn), lambda i: (0, i))

    packed = pl.pallas_call(
        partial(_loss_and_found_kernel, alpha),
        out_shape=jax.ShapeDtypeStruct((3, N), jnp.float32),
        grid=grid,
        in_specs=[in_spec, in_spec, in_spec],
        out_specs=out_spec,
        compiler_params=pltpu.CompilerParams(
            dimension_semantics=("parallel",),
            vmem_limit_bytes=vmem_limit_bytes),
    )(w, h, k)

    packed = packed[:, :N]
    # Shapes match torch: norm over dim 0 of (D, N) -> (N,)
    return packed[0], packed[1], packed[2]


if __name__ == "__main__":
    key = jax.random.PRNGKey(0)
    alpha = 0.5

    # Case 1: lane-aligned N, multi-tile Pallas path.
    # Case 2: unaligned N, exercises the clipped boundary block.
    # Case 3: tiny problem, exercises the plain-JAX fallback.
    for shape in [(1, 64, 8192), (1, 64, 5000), (1, 8, 300)]:
        kcase = jax.random.fold_in(key, shape[-1])
        ka, kb, kc = jax.random.split(kcase, 3)
        wait_list = jax.random.normal(ka, shape, dtype=jnp.float32)
        hit_list = jax.random.normal(kb, shape, dtype=jnp.float32)
        kill_list = jax.random.normal(kc, shape, dtype=jnp.float32)

        final_loss, hit_loss, kill_loss = loss_and_found(
            wait_list, hit_list, kill_list, alpha=alpha)
        jax.block_until_ready((final_loss, hit_loss, kill_loss))

        # Reference check in plain JAX (same math as the torch module).
        final_ref, hit_ref, kill_ref = _reference(
            jnp.squeeze(wait_list, 0), jnp.squeeze(hit_list, 0),
            jnp.squeeze(kill_list, 0), alpha)

        assert hit_loss.shape == (shape[-1],)
        assert kill_loss.shape == (shape[-1],)
        assert final_loss.shape == (shape[-1],)
        assert jnp.allclose(hit_loss, hit_ref, atol=1e-4, rtol=1e-5)
        assert jnp.allclose(kill_loss, kill_ref, atol=1e-4, rtol=1e-5)
        assert jnp.allclose(final_loss, final_ref, atol=1e-4, rtol=1e-5)

    print("KERNEL_OK")
</pallas_src>

<mosaic_0001>
module attributes {stable_mosaic.version = 11 : i64} {
  func.func @_loss_and_found_kernel(%arg0: i32, %arg1: memref<64x2048xf32, #tpu.memory_space<vmem>>, %arg2: memref<64x2048xf32, #tpu.memory_space<vmem>>, %arg3: memref<64x2048xf32, #tpu.memory_space<vmem>>, %arg4: memref<3x2048xf32, #tpu.memory_space<vmem>>) attributes {dimension_semantics = [#tpu.dimension_semantics<parallel>], iteration_bounds = array<i64: 4>, scalar_prefetch = 0 : i64, scratch_operands = 0 : i64, tpu.core_type = #tpu.core_type<tc>, window_params = [{transform_indices = @transform_0, window_bounds = array<i64: 64, 2048>}, {transform_indices = @transform_1, window_bounds = array<i64: 64, 2048>}, {transform_indices = @transform_2, window_bounds = array<i64: 64, 2048>}, {transform_indices = @transform_3, window_bounds = array<i64: 3, 2048>}]} {
    %c0 = arith.constant 0 : index
    %c0_0 = arith.constant 0 : index
    %0 = vector.load %arg1[%c0, %c0_0] : memref<64x2048xf32, #tpu.memory_space<vmem>>, vector<64x2048xf32>
    %c0_1 = arith.constant 0 : index
    %c0_2 = arith.constant 0 : index
    %1 = vector.load %arg2[%c0_1, %c0_2] : memref<64x2048xf32, #tpu.memory_space<vmem>>, vector<64x2048xf32>
    %c0_3 = arith.constant 0 : index
    %c0_4 = arith.constant 0 : index
    %2 = vector.load %arg3[%c0_3, %c0_4] : memref<64x2048xf32, #tpu.memory_space<vmem>>, vector<64x2048xf32>
    %3 = arith.subf %0, %1 : vector<64x2048xf32>
    %4 = arith.subf %0, %2 : vector<64x2048xf32>
    %5 = arith.mulf %3, %3 : vector<64x2048xf32>
    %cst = arith.constant dense<0.000000e+00> : vector<2048xf32>
    %6 = vector.multi_reduction <add>, %5, %cst [0] : vector<64x2048xf32> to vector<2048xf32>
    %7 = vector.shape_cast %6 : vector<2048xf32> to vector<1x2048xf32>
    %8 = math.sqrt %7 : vector<1x2048xf32>
    %9 = arith.mulf %4, %4 : vector<64x2048xf32>
    %cst_5 = arith.constant dense<0.000000e+00> : vector<2048xf32>
    %10 = vector.multi_reduction <add>, %9, %cst_5 [0] : vector<64x2048xf32> to vector<2048xf32>
    %11 = vector.shape_cast %10 : vector<2048xf32> to vector<1x2048xf32>
    %12 = math.sqrt %11 : vector<1x2048xf32>
    %13 = arith.subf %8, %12 : vector<1x2048xf32>
    %cst_6 = arith.constant 5.000000e-01 : f32
    %14 = vector.broadcast %cst_6 : f32 to vector<1x2048xf32>
    %15 = arith.addf %13, %14 : vector<1x2048xf32>
    %cst_7 = arith.constant 0.000000e+00 : f32
    %16 = vector.broadcast %cst_7 : f32 to vector<1x2048xf32>
    %17 = arith.maximumf %16, %15 : vector<1x2048xf32>
    %18 = tpu.concatenate %17, %8, %12 in 0 : vector<1x2048xf32>, vector<1x2048xf32>, vector<1x2048xf32> -> vector<3x2048xf32>
    %c0_8 = arith.constant 0 : index
    %c0_9 = arith.constant 0 : index
    %19 = vector.load %arg4[%c0_8, %c0_9] : memref<3x2048xf32, #tpu.memory_space<vmem>>, vector<3x2048xf32>
    tpu.vector_store %arg4[%c0_8, %c0_9], %18 {strides = array<i32>} : memref<3x2048xf32, #tpu.memory_space<vmem>>, vector<3x2048xf32>,
    return
  }
  func.func @transform_0(%arg0: i32) -> (i32, i32) {
    %c0_i32 = arith.constant 0 : i32
    %c0_i32_0 = arith.constant 0 : i32
    return %c0_i32, %arg0 : i32, i32
  }
  func.func @transform_1(%arg0: i32) -> (i32, i32) {
    %c0_i32 = arith.constant 0 : i32
    %c0_i32_0 = arith.constant 0 : i32
    return %c0_i32, %arg0 : i32, i32
  }
  func.func @transform_2(%arg0: i32) -> (i32, i32) {
    %c0_i32 = arith.constant 0 : i32
    %c0_i32_0 = arith.constant 0 : i32
    return %c0_i32, %arg0 : i32, i32
  }
  func.func @transform_3(%arg0: i32) -> (i32, i32) {
    %c0_i32 = arith.constant 0 : i32
    %c0_i32_0 = arith.constant 0 : i32
    return %c0_i32, %arg0 : i32, i32
  }
}

</mosaic_0001>

<llo_original>
// kernel: tpu_custom_call.1
$region0: #{tpu_custom_call.1}
  #allocation0 [shape = 'u32[]', space=smem, size = 0x4, offset = 0x4, fixed_abs, tag = 'smem constant byte address 0x4 - core index']
  #allocation1 [shape = 'u32[144,128]{1,0:T(1,128)}', space=vmem, size = 0x12000, scoped, tag = 'internal scratch']
  %s0 = inlined_call_operand.hbm [shape: f32[64,8192], index: 0, kind: input, shape index: {}]
  %s1 = inlined_call_operand.hbm [shape: f32[64,8192], index: 1, kind: input, shape index: {}]
  %s2 = inlined_call_operand.hbm [shape: f32[64,8192], index: 2, kind: input, shape index: {}]
  %s3 = inlined_call_operand.hbm [shape: f32[3,8192], index: 3, kind: output, shape index: {}]
  %s4 = sld [smem:[#allocation0]]
  $region57: #{tpu_custom_call.1} parent=0
    _
  %s6 = ssub.s32 1, %s4
  %s7 = scalar_select 0, %s6, %s4
  $region1: #{tpu_custom_call.1} parent=0
    #allocation2 [shape = 'u8[1048576]{0}', space=vmem, size = 0x100000, scoped, tag = 'input window, operand 0']
    #allocation3 [shape = 's32[2]{0}', space=sflag, size = 0x8, scoped, tag = 'scoped memory for tpu_custom_call.1']
    #allocation4 [shape = 's32[2]{0}', space=sflag, size = 0x8, scoped, tag = 'scoped memory for tpu_custom_call.1']
    #allocation5 [shape = 'u8[1048576]{0}', space=vmem, size = 0x100000, scoped, tag = 'input window, operand 1']
    #allocation6 [shape = 's32[2]{0}', space=sflag, size = 0x8, scoped, tag = 'scoped memory for tpu_custom_call.1']
    #allocation7 [shape = 'u8[1048576]{0}', space=vmem, size = 0x100000, scoped, tag = 'input window, operand 2']
    #allocation8 [shape = 'u8[65536]{0}', space=vmem, size = 0x10000, scoped, tag = 'output window, operand 0']
    %8 = vsyncpa [#allocation3], 0
    %s9 = scalar_lea.sflag [#allocation3], 1
    %10 = vsyncpa %s9, 0
    %11 = vsyncpa [#allocation6], 0
    %s12 = scalar_lea.sflag [#allocation6], 1
    %13 = vsyncpa %s12, 0
    %14 = vsyncpa [#allocation4], 0
    %s15 = scalar_lea.sflag [#allocation4], 1
    %16 = vsyncpa %s15, 0
    loop: start=0, step=1, limit=6
    $region2: #{tpu_custom_call.1} parent=1 // loop_pre_header
      _
    $region3: #{tpu_custom_call.1} parent=1 // loop_header
      %s18 = sphi 0, %s22
      %p19 = scmp.ge.s32.totalorder %s18, 6
      %s28 = sphi 0, %s30
      %s31 = sphi 0, %s28
      %s32 = sphi 0, %s31
      %s48 = sphi 0, %s32
      %s54 = sphi 0, %s56
      %s57 = sphi 0, %s54
      %s58 = sphi 0, %s57
      %s74 = sphi 0, %s58
      %s80 = sphi 0, %s82
      %s83 = sphi 0, %s80
      %s84 = sphi 0, %s83
      %s100 = sphi 0, %s84
      %s106 = sphi 0, %s108
      %s109 = sphi 0, %s106
      %s110 = sphi 0, %s109
      %s126 = sphi 0, %s110
    $region4: #{tpu_custom_call.1} parent=1 // loop_header_branch
      %21 = sbr.rel (%p19) target = $region8
    $region5: #{tpu_custom_call.1} parent=1 // loop_body
      %s23 = ssub.s32 %s18, 1
      %s24 = ssub.s32 %s18, 2
      %s25 = sadd.s32 %s18, 1
      %s26 = ssub.s32 %s18, %s25
      %p27 = scmp.eq.s32.totalorder %s26, 0
      %s29 = sadd.s32 %s28, 1
      %s30 = scalar_select %p27, %s28, %s29
      %p33 = pneg %p27
      %p34 = scmp.eq.s32.totalorder %s18, 3
      %p35 = por %p33, %p34
      %p36 = scmp.ne.s32.totalorder %s28, %s31
      %p37 = scmp.eq.s32.totalorder %s18, 0
      %p38 = por %p36, %p37
      %p39 = scmp.ne.s32.totalorder %s28, %s31
      %p40 = scmp.eq.s32.totalorder %s23, 3
      %p41 = por %p39, %p40
      %p42 = scmp.ne.s32.totalorder %s31, %s32
      %p43 = scmp.eq.s32.totalorder %s23, 0
      %p44 = por %p42, %p43
      %p45 = scmp.ne.s32.totalorder %s31, %s32
      %p46 = scmp.eq.s32.totalorder %s24, 3
      %p47 = por %p45, %p46
      %p49 = scmp.ne.s32.totalorder %s32, %s48
      %p50 = scmp.eq.s32.totalorder %s24, 0
      %p51 = por %p49, %p50
      %s52 = ssub.s32 %s18, %s25
      %p53 = scmp.eq.s32.totalorder %s52, 0
      %s55 = sadd.s32 %s54, 1
      %s56 = scalar_select %p53, %s54, %s55
      %p59 = pneg %p53
      %p60 = scmp.eq.s32.totalorder %s18, 3
      %p61 = por %p59, %p60
      %p62 = scmp.ne.s32.totalorder %s54, %s57
      %p63 = scmp.eq.s32.totalorder %s18, 0
      %p64 = por %p62, %p63
      %p65 = scmp.ne.s32.totalorder %s54, %s57
      %p66 = scmp.eq.s32.totalorder %s23, 3
      %p67 = por %p65, %p66
      %p68 = scmp.ne.s32.totalorder %s57, %s58
      %p69 = scmp.eq.s32.totalorder %s23, 0
      %p70 = por %p68, %p69
      %p71 = scmp.ne.s32.totalorder %s57, %s58
      %p72 = scmp.eq.s32.totalorder %s24, 3
      %p73 = por %p71, %p72
      %p75 = scmp.ne.s32.totalorder %s58, %s74
      %p76 = scmp.eq.s32.totalorder %s24, 0
      %p77 = por %p75, %p76
      %s78 = ssub.s32 %s18, %s25
      %p79 = scmp.eq.s32.totalorder %s78, 0
      %s81 = sadd.s32 %s80, 1
      %s82 = scalar_select %p79, %s80, %s81
      %p85 = pneg %p79
      %p86 = scmp.eq.s32.totalorder %s18, 3
      %p87 = por %p85, %p86
      %p88 = scmp.ne.s32.totalorder %s80, %s83
      %p89 = scmp.eq.s32.totalorder %s18, 0
      %p90 = por %p88, %p89
      %p91 = scmp.ne.s32.totalorder %s80, %s83
      %p92 = scmp.eq.s32.totalorder %s23, 3
      %p93 = por %p91, %p92
      %p94 = scmp.ne.s32.totalorder %s83, %s84
      %p95 = scmp.eq.s32.totalorder %s23, 0
      %p96 = por %p94, %p95
      %p97 = scmp.ne.s32.totalorder %s83, %s84
      %p98 = scmp.eq.s32.totalorder %s24, 3
      %p99 = por %p97, %p98
      %p101 = scmp.ne.s32.totalorder %s84, %s100
      %p102 = scmp.eq.s32.totalorder %s24, 0
      %p103 = por %p101, %p102
      %s104 = ssub.s32 %s18, %s25
      %p105 = scmp.eq.s32.totalorder %s104, 0
      %s107 = sadd.s32 %s106, 1
      %s108 = scalar_select %p105, %s106, %s107
      %p111 = pneg %p105
      %p112 = scmp.eq.s32.totalorder %s18, 3
      %p113 = por %p111, %p112
      %p114 = scmp.ne.s32.totalorder %s106, %s109
      %p115 = scmp.eq.s32.totalorder %s18, 0
      %p116 = por %p114, %p115
      %p117 = scmp.ne.s32.totalorder %s106, %s109
      %p118 = scmp.eq.s32.totalorder %s23, 3
      %p119 = por %p117, %p118
      %p120 = scmp.ne.s32.totalorder %s109, %s110
      %p121 = scmp.eq.s32.totalorder %s23, 0
      %p122 = por %p120, %p121
      %p123 = scmp.ne.s32.totalorder %s109, %s110
      %p124 = scmp.eq.s32.totalorder %s24, 3
      %p125 = por %p123, %p124
      %p127 = scmp.ne.s32.totalorder %s110, %s126
      %p128 = scmp.eq.s32.totalorder %s24, 0
      %p129 = por %p127, %p128
      %p130 = scmp.le.s32.totalorder 1, %s18
      %p131 = scmp.lt.s32.totalorder %s18, 5
      %p132 = pnand %p130, %p131
      %p133 = pneg %p132
      // Predicated region
      $region9: #{tpu_custom_call.1} parent=5 // pred_check
        _
      $region10: #{tpu_custom_call.1} parent=5 // pred_check_branch
        %135 = sbr.rel (%p132) target = $region12
      $region11: #{tpu_custom_call.1} parent=5 // pred_region
        %s136 = ssub.s32 %s18, 1
      $region12: #{tpu_custom_call.1} parent=5 // pred_fallthru
        _
      %p137 = scmp.lt.s32.totalorder %s18, 4
      // Predicated region
      $region13: #{tpu_custom_call.1} parent=5 // pred_check
        %p138 = pneg %p137
      $region14: #{tpu_custom_call.1} parent=5 // pred_check_branch
        %140 = sbr.rel (%p138) target = $region16
      $region15: #{tpu_custom_call.1} parent=5 // pred_region
        // Predicated region
        $region17: #{tpu_custom_call.1} parent=15 // pred_check
          %p141 = pneg %p38
        $region18: #{tpu_custom_call.1} parent=15 // pred_check_branch
          %143 = sbr.rel (%p141) target = $region20
        $region19: #{tpu_custom_call.1} parent=15 // pred_region
          %s144 = sand.u32 %s28, 1
          %s145 = scalar_lea.sflag [#allocation3], %s144
          %s146 = sand.u32 %s28, 1
          %s147 = smul.addr %s146, 1024
          %s148 = scalar_lea.vmem [#allocation2], %s147
          %s149 = smul.u32 16, %s18
          %s151 = ssub.s32 16384, 16384
          %152 = vsyncadd %s145, %s151
          %s153 = smul.addr %s149, 128
          %s154 = scalar_lea.hbm %s0, %s153
          %s155 = sshll.u32 %s148, 4
          %s156 = int_to_ptr.vmem [resolvable:$true] %s155
          %161 = dma.hbm_to_vmem [thread:$0]  %s154, 16384, %s156, %s145, 8192, 2048, 128
        $region20: #{tpu_custom_call.1} parent=15 // pred_fallthru
          _
        // Predicated region
        $region21: #{tpu_custom_call.1} parent=15 // pred_check
          %p162 = pneg %p64
        $region22: #{tpu_custom_call.1} parent=15 // pred_check_branch
          %164 = sbr.rel (%p162) target = $region24
        $region23: #{tpu_custom_call.1} parent=15 // pred_region
          %s165 = sand.u32 %s18, 1
          %s166 = scalar_lea.sflag [#allocation6], %s165
          %s167 = sand.u32 %s54, 1
          %s168 = smul.addr %s167, 1024
          %s169 = scalar_lea.vmem [#allocation5], %s168
          %s170 = smul.u32 16, %s18
          %s172 = ssub.s32 16384, 16384
          %173 = vsyncadd %s166, %s172
          %s174 = smul.addr %s170, 128
          %s175 = scalar_lea.hbm %s1, %s174
          %s176 = sshll.u32 %s169, 4
          %s177 = int_to_ptr.vmem [resolvable:$true] %s176
          %182 = dma.hbm_to_vmem [thread:$0]  %s175, 16384, %s177, %s166, 8192, 2048, 128
        $region24: #{tpu_custom_call.1} parent=15 // pred_fallthru
          _
        // Predicated region
        $region25: #{tpu_custom_call.1} parent=15 // pred_check
          %p183 = pneg %p90
        $region26: #{tpu_custom_call.1} parent=15 // pred_check_branch
          %185 = sbr.rel (%p183) target = $region28
        $region27: #{tpu_custom_call.1} parent=15 // pred_region
          %s186 = sand.u32 %s18, 1
          %s187 = scalar_lea.sflag [#allocation6], %s186
          %s188 = sand.u32 %s80, 1
          %s189 = smul.addr %s188, 1024
          %s190 = scalar_lea.vmem [#allocation7], %s189
          %s191 = smul.u32 16, %s18
          %s193 = ssub.s32 16384, 16384
          %194 = vsyncadd %s187, %s193
          %s195 = smul.addr %s191, 128
          %s196 = scalar_lea.hbm %s2, %s195
          %s197 = sshll.u32 %s190, 4
          %s198 = int_to_ptr.vmem [resolvable:$true] %s197
          %203 = dma.hbm_to_vmem [thread:$0]  %s196, 16384, %s198, %s187, 8192, 2048, 128
        $region28: #{tpu_custom_call.1} parent=15 // pred_fallthru
          _
      $region16: #{tpu_custom_call.1} parent=5 // pred_fallthru
        _
      %p204 = scmp.le.s32.totalorder 1, %s18
      %p205 = scmp.lt.s32.totalorder %s18, 5
      %p206 = pnand %p204, %p205
      %p207 = pneg %p206
      // Predicated region
      $region29: #{tpu_custom_call.1} parent=5 // pred_check
        _
      $region30: #{tpu_custom_call.1} parent=5 // pred_check_branch
        %209 = sbr.rel (%p206) target = $region32
      $region31: #{tpu_custom_call.1} parent=5 // pred_region
        %s210 = ssub.s32 %s18, 1
        %s211 = sand.u32 %s31, 1
        %s212 = scalar_lea.sflag [#allocation3], %s211
        %s213 = sand.u32 %s31, 1
        %s214 = smul.addr %s213, 1024
        %s215 = scalar_lea.vmem [#allocation2], %s214
        // Predicated region
        $region33: #{tpu_custom_call.1} parent=31 // pred_check
          %p216 = pneg %p44
        $region34: #{tpu_custom_call.1} parent=31 // pred_check_branch
          %218 = sbr.rel (%p216) target = $region36
        $region35: #{tpu_custom_call.1} parent=31 // pred_region
          %219 = dma.done %s212, 16384
        $region36: #{tpu_custom_call.1} parent=31 // pred_fallthru
          _
        %s220 = sand.u32 %s23, 1
        %s221 = scalar_lea.sflag [#allocation6], %s220
        %s222 = sand.u32 %s57, 1
        %s223 = smul.addr %s222, 1024
        %s224 = scalar_lea.vmem [#allocation5], %s223
        // Predicated region
        $region37: #{tpu_custom_call.1} parent=31 // pred_check
          %p225 = pneg %p70
        $region38: #{tpu_custom_call.1} parent=31 // pred_check_branch
          %227 = sbr.rel (%p225) target = $region40
        $region39: #{tpu_custom_call.1} parent=31 // pred_region
          %228 = dma.done %s221, 16384
        $region40: #{tpu_custom_call.1} parent=31 // pred_fallthru
          _
        %s229 = sand.u32 %s23, 1
        %s230 = scalar_lea.sflag [#allocation6], %s229
        %s231 = sand.u32 %s83, 1
        %s232 = smul.addr %s231, 1024
        %s233 = scalar_lea.vmem [#allocation7], %s232
        // Predicated region
        $region41: #{tpu_custom_call.1} parent=31 // pred_check
          %p234 = pneg %p96
        $region42: #{tpu_custom_call.1} parent=31 // pred_check_branch
          %236 = sbr.rel (%p234) target = $region44
        $region43: #{tpu_custom_call.1} parent=31 // pred_region
          %237 = dma.done %s230, 16384
        $region44: #{tpu_custom_call.1} parent=31 // pred_fallthru
          _
        %s238 = sand.u32 %s31, 1
        %s239 = scalar_lea.sflag [#allocation3], %s238
        %s240 = sand.u32 %s31, 1
        %s241 = smul.addr %s240, 1024
        %s242 = scalar_lea.vmem [#allocation2], %s241
        %p243 = pneg %p44
        %p244 = pneg %p41
        %s245 = sand.u32 %s23, 1
        %s246 = scalar_lea.sflag [#allocation6], %s245
        %s247 = sand.u32 %s57, 1
        %s248 = smul.addr %s247, 1024
        %s249 = scalar_lea.vmem [#allocation5], %s248
        %p250 = pneg %p70
        %p251 = pneg %p67
        %s252 = sand.u32 %s23, 1
        %s253 = scalar_lea.sflag [#allocation6], %s252
        %s254 = sand.u32 %s83, 1
        %s255 = smul.addr %s254, 1024
        %s256 = scalar_lea.vmem [#allocation7], %s255
        %p257 = pneg %p96
        %p258 = pneg %p93
        %p259 = pneg %p122
        %p260 = pneg %p119
        %s261 = sand.u32 %s109, 1
        %s262 = scalar_lea.sflag [#allocation4], %s261
        %s263 = sand.u32 %s109, 1
        %s264 = smul.addr %s263, 64
        %s265 = scalar_lea.vmem [#allocation8], %s264
        %s266 = smul.u32 16, %s23
        %s267 = smul.u32 16, %s23
        %s268 = smul.u32 16, %s23
        %s269 = smul.u32 16, %s23
        %v270 = vld [vmem:[%s215] sm:$0xff]
        %v271 = vld [vmem:[%s215 + $0x8] sm:$0xff]
        %v272 = vld [vmem:[%s215 + $0x10] sm:$0xff]
        %v273 = vld [vmem:[%s215 + $0x18] sm:$0xff]
        %v274 = vld [vmem:[%s215 + $0x20] sm:$0xff]
        %v275 = vld [vmem:[%s215 + $0x28] sm:$0xff]
        %v276 = vld [vmem:[%s215 + $0x30] sm:$0xff]
        %v277 = vld [vmem:[%s215 + $0x38] sm:$0xff]
        %v278 = vld [vmem:[%s215 + $0x40] sm:$0xff]
        %v279 = vld [vmem:[%s215 + $0x48] sm:$0xff]
        %v280 = vld [vmem:[%s215 + $0x50] sm:$0xff]
        %v281 = vld [vmem:[%s215 + $0x58] sm:$0xff]
        %v282 = vld [vmem:[%s215 + $0x60] sm:$0xff]
        %v283 = vld [vmem:[%s215 + $0x68] sm:$0xff]
        %v284 = vld [vmem:[%s215 + $0x70] sm:$0xff]
        %v285 = vld [vmem:[%s215 + $0x78] sm:$0xff]
        %v286 = vld [vmem:[%s215 + $0x80] sm:$0xff]
        %v287 = vld [vmem:[%s215 + $0x88] sm:$0xff]
        %v288 = vld [vmem:[%s215 + $0x90] sm:$0xff]
        %v289 = vld [vmem:[%s215 + $0x98] sm:$0xff]
        %v290 = vld [vmem:[%s215 + $0xa0] sm:$0xff]
        %v291 = vld [vmem:[%s215 + $0xa8] sm:$0xff]
        %v292 = vld [vmem:[%s215 + $0xb0] sm:$0xff]
        %v293 = vld [vmem:[%s215 + $0xb8] sm:$0xff]
        %v294 = vld [vmem:[%s215 + $0xc0] sm:$0xff]
        %v295 = vld [vmem:[%s215 + $0xc8] sm:$0xff]
        %v296 = vld [vmem:[%s215 + $0xd0] sm:$0xff]
        %v297 = vld [vmem:[%s215 + $0xd8] sm:$0xff]
        %v298 = vld [vmem:[%s215 + $0xe0] sm:$0xff]
        %v299 = vld [vmem:[%s215 + $0xe8] sm:$0xff]
        %v300 = vld [vmem:[%s215 + $0xf0] sm:$0xff]
        %v301 = vld [vmem:[%s215 + $0xf8] sm:$0xff]
        %v302 = vld [vmem:[%s215 + $0x100] sm:$0xff]
        %v303 = vld [vmem:[%s215 + $0x108] sm:$0xff]
        %v304 = vld [vmem:[%s215 + $0x110] sm:$0xff]
        %v305 = vld [vmem:[%s215 + $0x118] sm:$0xff]
        %v306 = vld [vmem:[%s215 + $0x120] sm:$0xff]
        %v307 = vld [vmem:[%s215 + $0x128] sm:$0xff]
        %v308 = vld [vmem:[%s215 + $0x130] sm:$0xff]
        %v309 = vld [vmem:[%s215 + $0x138] sm:$0xff]
        %v310 = vld [vmem:[%s215 + $0x140] sm:$0xff]
        %v311 = vld [vmem:[%s215 + $0x148] sm:$0xff]
        %v312 = vld [vmem:[%s215 + $0x150] sm:$0xff]
        %v313 = vld [vmem:[%s215 + $0x158] sm:$0xff]
        %v314 = vld [vmem:[%s215 + $0x160] sm:$0xff]
        %v315 = vld [vmem:[%s215 + $0x168] sm:$0xff]
        %v316 = vld [vmem:[%s215 + $0x170] sm:$0xff]
        %v317 = vld [vmem:[%s215 + $0x178] sm:$0xff]
        %v318 = vld [vmem:[%s215 + $0x180] sm:$0xff]
        %v319 = vld [vmem:[%s215 + $0x188] sm:$0xff]
        %v320 = vld [vmem:[%s215 + $0x190] sm:$0xff]
        %v321 = vld [vmem:[%s215 + $0x198] sm:$0xff]
        %v322 = vld [vmem:[%s215 + $0x1a0] sm:$0xff]
        %v323 = vld [vmem:[%s215 + $0x1a8] sm:$0xff]
        %v324 = vld [vmem:[%s215 + $0x1b0] sm:$0xff]
        %v325 = vld [vmem:[%s215 + $0x1b8] sm:$0xff]
        %v326 = vld [vmem:[%s215 + $0x1c0] sm:$0xff]
        %v327 = vld [vmem:[%s215 + $0x1c8] sm:$0xff]
        %v328 = vld [vmem:[%s215 + $0x1d0] sm:$0xff]
        %v329 = vld [vmem:[%s215 + $0x1d8] sm:$0xff]
        %v330 = vld [vmem:[%s215 + $0x1e0] sm:$0xff]
        %v331 = vld [vmem:[%s215 + $0x1e8] sm:$0xff]
        %v332 = vld [vmem:[%s215 + $0x1f0] sm:$0xff]
        %v333 = vld [vmem:[%s215 + $0x1f8] sm:$0xff]
        %v334 = vld [vmem:[%s215 + $0x200] sm:$0xff]
        %v335 = vld [vmem:[%s215 + $0x208] sm:$0xff]
        %v336 = vld [vmem:[%s215 + $0x210] sm:$0xff]
        %v337 = vld [vmem:[%s215 + $0x218] sm:$0xff]
        %v338 = vld [vmem:[%s215 + $0x220] sm:$0xff]
        %v339 = vld [vmem:[%s215 + $0x228] sm:$0xff]
        %v340 = vld [vmem:[%s215 + $0x230] sm:$0xff]
        %v341 = vld [vmem:[%s215 + $0x238] sm:$0xff]
        %v342 = vld [vmem:[%s215 + $0x240] sm:$0xff]
        %v343 = vld [vmem:[%s215 + $0x248] sm:$0xff]
        %v344 = vld [vmem:[%s215 + $0x250] sm:$0xff]
        %v345 = vld [vmem:[%s215 + $0x258] sm:$0xff]
        %v346 = vld [vmem:[%s215 + $0x260] sm:$0xff]
        %v347 = vld [vmem:[%s215 + $0x268] sm:$0xff]
        %v348 = vld [vmem:[%s215 + $0x270] sm:$0xff]
        %v349 = vld [vmem:[%s215 + $0x278] sm:$0xff]
        %v350 = vld [vmem:[%s215 + $0x280] sm:$0xff]
        %v351 = vld [vmem:[%s215 + $0x288] sm:$0xff]
        %v352 = vld [vmem:[%s215 + $0x290] sm:$0xff]
        %v353 = vld [vmem:[%s215 + $0x298] sm:$0xff]
        %v354 = vld [vmem:[%s215 + $0x2a0] sm:$0xff]
        %v355 = vld [vmem:[%s215 + $0x2a8] sm:$0xff]
        %v356 = vld [vmem:[%s215 + $0x2b0] sm:$0xff]
        %v357 = vld [vmem:[%s215 + $0x2b8] sm:$0xff]
        %v358 = vld [vmem:[%s215 + $0x2c0] sm:$0xff]
        %v359 = vld [vmem:[%s215 + $0x2c8] sm:$0xff]
        %v360 = vld [vmem:[%s215 + $0x2d0] sm:$0xff]
        %v361 = vld [vmem:[%s215 + $0x2d8] sm:$0xff]
        %v362 = vld [vmem:[%s215 + $0x2e0] sm:$0xff]
        %v363 = vld [vmem:[%s215 + $0x2e8] sm:$0xff]
        %v364 = vld [vmem:[%s215 + $0x2f0] sm:$0xff]
        %v365 = vld [vmem:[%s215 + $0x2f8] sm:$0xff]
        %v366 = vld [vmem:[%s215 + $0x300] sm:$0xff]
        %v367 = vld [vmem:[%s215 + $0x308] sm:$0xff]
        %v368 = vld [vmem:[%s215 + $0x310] sm:$0xff]
        %v369 = vld [vmem:[%s215 + $0x318] sm:$0xff]
        %v370 = vld [vmem:[%s215 + $0x320] sm:$0xff]
        %v371 = vld [vmem:[%s215 + $0x328] sm:$0xff]
        %v372 = vld [vmem:[%s215 + $0x330] sm:$0xff]
        %v373 = vld [vmem:[%s215 + $0x338] sm:$0xff]
        %v374 = vld [vmem:[%s215 + $0x340] sm:$0xff]
        %v375 = vld [vmem:[%s215 + $0x348] sm:$0xff]
        %v376 = vld [vmem:[%s215 + $0x350] sm:$0xff]
        %v377 = vld [vmem:[%s215 + $0x358] sm:$0xff]
        %v378 = vld [vmem:[%s215 + $0x360] sm:$0xff]
        %v379 = vld [vmem:[%s215 + $0x368] sm:$0xff]
        %v380 = vld [vmem:[%s215 + $0x370] sm:$0xff]
        %v381 = vld [vmem:[%s215 + $0x378] sm:$0xff]
        %v382 = vld [vmem:[%s215 + $0x380] sm:$0xff]
        %v383 = vld [vmem:[%s215 + $0x388] sm:$0xff]
        %v384 = vld [vmem:[%s215 + $0x390] sm:$0xff]
        %v385 = vld [vmem:[%s215 + $0x398] sm:$0xff]
        %v386 = vld [vmem:[%s215 + $0x3a0] sm:$0xff]
        %v387 = vld [vmem:[%s215 + $0x3a8] sm:$0xff]
        %v388 = vld [vmem:[%s215 + $0x3b0] sm:$0xff]
        %v389 = vld [vmem:[%s215 + $0x3b8] sm:$0xff]
        %v390 = vld [vmem:[%s215 + $0x3c0] sm:$0xff]
        %v391 = vld [vmem:[%s215 + $0x3c8] sm:$0xff]
        %v392 = vld [vmem:[%s215 + $0x3d0] sm:$0xff]
        %v393 = vld [vmem:[%s215 + $0x3d8] sm:$0xff]
        %v394 = vld [vmem:[%s215 + $0x3e0] sm:$0xff]
        %v395 = vld [vmem:[%s215 + $0x3e8] sm:$0xff]
        %v396 = vld [vmem:[%s215 + $0x3f0] sm:$0xff]
        %v397 = vld [vmem:[%s215 + $0x3f8] sm:$0xff]
        %v398 = vld [vmem:[%s224] sm:$0xff]
        %v399 = vld [vmem:[%s224 + $0x8] sm:$0xff]
        %v400 = vld [vmem:[%s224 + $0x10] sm:$0xff]
        %v401 = vld [vmem:[%s224 + $0x18] sm:$0xff]
        %v402 = vld [vmem:[%s224 + $0x20] sm:$0xff]
        %v403 = vld [vmem:[%s224 + $0x28] sm:$0xff]
        %v404 = vld [vmem:[%s224 + $0x30] sm:$0xff]
        %v405 = vld [vmem:[%s224 + $0x38] sm:$0xff]
        %v406 = vld [vmem:[%s224 + $0x40] sm:$0xff]
        %v407 = vld [vmem:[%s224 + $0x48] sm:$0xff]
        %v408 = vld [vmem:[%s224 + $0x50] sm:$0xff]
        %v409 = vld [vmem:[%s224 + $0x58] sm:$0xff]
        %v410 = vld [vmem:[%s224 + $0x60] sm:$0xff]
        %v411 = vld [vmem:[%s224 + $0x68] sm:$0xff]
        %v412 = vld [vmem:[%s224 + $0x70] sm:$0xff]
        %v413 = vld [vmem:[%s224 + $0x78] sm:$0xff]
        %v414 = vld [vmem:[%s224 + $0x80] sm:$0xff]
        %v415 = vld [vmem:[%s224 + $0x88] sm:$0xff]
        %v416 = vld [vmem:[%s224 + $0x90] sm:$0xff]
        %v417 = vld [vmem:[%s224 + $0x98] sm:$0xff]
        %v418 = vld [vmem:[%s224 + $0xa0] sm:$0xff]
        %v419 = vld [vmem:[%s224 + $0xa8] sm:$0xff]
        %v420 = vld [vmem:[%s224 + $0xb0] sm:$0xff]
        %v421 = vld [vmem:[%s224 + $0xb8] sm:$0xff]
        %v422 = vld [vmem:[%s224 + $0xc0] sm:$0xff]
        %v423 = vld [vmem:[%s224 + $0xc8] sm:$0xff]
        %v424 = vld [vmem:[%s224 + $0xd0] sm:$0xff]
        %v425 = vld [vmem:[%s224 + $0xd8] sm:$0xff]
        %v426 = vld [vmem:[%s224 + $0xe0] sm:$0xff]
        %v427 = vld [vmem:[%s224 + $0xe8] sm:$0xff]
        %v428 = vld [vmem:[%s224 + $0xf0] sm:$0xff]
        %v429 = vld [vmem:[%s224 + $0xf8] sm:$0xff]
        %v430 = vld [vmem:[%s224 + $0x100] sm:$0xff]
        %v431 = vld [vmem:[%s224 + $0x108] sm:$0xff]
        %v432 = vld [vmem:[%s224 + $0x110] sm:$0xff]
        %v433 = vld [vmem:[%s224 + $0x118] sm:$0xff]
        %v434 = vld [vmem:[%s224 + $0x120] sm:$0xff]
        %v435 = vld [vmem:[%s224 + $0x128] sm:$0xff]
        %v436 = vld [vmem:[%s224 + $0x130] sm:$0xff]
        %v437 = vld [vmem:[%s224 + $0x138] sm:$0xff]
        %v438 = vld [vmem:[%s224 + $0x140] sm:$0xff]
        %v439 = vld [vmem:[%s224 + $0x148] sm:$0xff]
        %v440 = vld [vmem:[%s224 + $0x150] sm:$0xff]
        %v441 = vld [vmem:[%s224 + $0x158] sm:$0xff]
        %v442 = vld [vmem:[%s224 + $0x160] sm:$0xff]
        %v443 = vld [vmem:[%s224 + $0x168] sm:$0xff]
        %v444 = vld [vmem:[%s224 + $0x170] sm:$0xff]
        %v445 = vld [vmem:[%s224 + $0x178] sm:$0xff]
        %v446 = vld [vmem:[%s224 + $0x180] sm:$0xff]
        %v447 = vld [vmem:[%s224 + $0x188] sm:$0xff]
        %v448 = vld [vmem:[%s224 + $0x190] sm:$0xff]
        %v449 = vld [vmem:[%s224 + $0x198] sm:$0xff]
        %v450 = vld [vmem:[%s224 + $0x1a0] sm:$0xff]
        %v451 = vld [vmem:[%s224 + $0x1a8] sm:$0xff]
        %v452 = vld [vmem:[%s224 + $0x1b0] sm:$0xff]
        %v453 = vld [vmem:[%s224 + $0x1b8] sm:$0xff]
        %v454 = vld [vmem:[%s224 + $0x1c0] sm:$0xff]
        %v455 = vld [vmem:[%s224 + $0x1c8] sm:$0xff]
        %v456 = vld [vmem:[%s224 + $0x1d0] sm:$0xff]
        %v457 = vld [vmem:[%s224 + $0x1d8] sm:$0xff]
        %v458 = vld [vmem:[%s224 + $0x1e0] sm:$0xff]
        %v459 = vld [vmem:[%s224 + $0x1e8] sm:$0xff]
        %v460 = vld [vmem:[%s224 + $0x1f0] sm:$0xff]
        %v461 = vld [vmem:[%s224 + $0x1f8] sm:$0xff]
        %v462 = vld [vmem:[%s224 + $0x200] sm:$0xff]
        %v463 = vld [vmem:[%s224 + $0x208] sm:$0xff]
        %v464 = vld [vmem:[%s224 + $0x210] sm:$0xff]
        %v465 = vld [vmem:[%s224 + $0x218] sm:$0xff]
        %v466 = vld [vmem:[%s224 + $0x220] sm:$0xff]
        %v467 = vld [vmem:[%s224 + $0x228] sm:$0xff]
        %v468 = vld [vmem:[%s224 + $0x230] sm:$0xff]
        %v469 = vld [vmem:[%s224 + $0x238] sm:$0xff]
        %v470 = vld [vmem:[%s224 + $0x240] sm:$0xff]
        %v471 = vld [vmem:[%s224 + $0x248] sm:$0xff]
        %v472 = vld [vmem:[%s224 + $0x250] sm:$0xff]
        %v473 = vld [vmem:[%s224 + $0x258] sm:$0xff]
        %v474 = vld [vmem:[%s224 + $0x260] sm:$0xff]
        %v475 = vld [vmem:[%s224 + $0x268] sm:$0xff]
        %v476 = vld [vmem:[%s224 + $0x270] sm:$0xff]
        %v477 = vld [vmem:[%s224 + $0x278] sm:$0xff]
        %v478 = vld [vmem:[%s224 + $0x280] sm:$0xff]
        %v479 = vld [vmem:[%s224 + $0x288] sm:$0xff]
        %v480 = vld [vmem:[%s224 + $0x290] sm:$0xff]
        %v481 = vld [vmem:[%s224 + $0x298] sm:$0xff]
        %v482 = vld [vmem:[%s224 + $0x2a0] sm:$0xff]
        %v483 = vld [vmem:[%s224 + $0x2a8] sm:$0xff]
        %v484 = vld [vmem:[%s224 + $0x2b0] sm:$0xff]
        %v485 = vld [vmem:[%s224 + $0x2b8] sm:$0xff]
        %v486 = vld [vmem:[%s224 + $0x2c0] sm:$0xff]
        %v487 = vld [vmem:[%s224 + $0x2c8] sm:$0xff]
        %v488 = vld [vmem:[%s224 + $0x2d0] sm:$0xff]
        %v489 = vld [vmem:[%s224 + $0x2d8] sm:$0xff]
        %v490 = vld [vmem:[%s224 + $0x2e0] sm:$0xff]
        %v491 = vld [vmem:[%s224 + $0x2e8] sm:$0xff]
        %v492 = vld [vmem:[%s224 + $0x2f0] sm:$0xff]
        %v493 = vld [vmem:[%s224 + $0x2f8] sm:$0xff]
        %v494 = vld [vmem:[%s224 + $0x300] sm:$0xff]
        %v495 = vld [vmem:[%s224 + $0x308] sm:$0xff]
        %v496 = vld [vmem:[%s224 + $0x310] sm:$0xff]
        %v497 = vld [vmem:[%s224 + $0x318] sm:$0xff]
        %v498 = vld [vmem:[%s224 + $0x320] sm:$0xff]
        %v499 = vld [vmem:[%s224 + $0x328] sm:$0xff]
        %v500 = vld [vmem:[%s224 + $0x330] sm:$0xff]
        %v501 = vld [vmem:[%s224 + $0x338] sm:$0xff]
        %v502 = vld [vmem:[%s224 + $0x340] sm:$0xff]
        %v503 = vld [vmem:[%s224 + $0x348] sm:$0xff]
        %v504 = vld [vmem:[%s224 + $0x350] sm:$0xff]
        %v505 = vld [vmem:[%s224 + $0x358] sm:$0xff]
        %v506 = vld [vmem:[%s224 + $0x360] sm:$0xff]
        %v507 = vld [vmem:[%s224 + $0x368] sm:$0xff]
        %v508 = vld [vmem:[%s224 + $0x370] sm:$0xff]
        %v509 = vld [vmem:[%s224 + $0x378] sm:$0xff]
        %v510 = vld [vmem:[%s224 + $0x380] sm:$0xff]
        %v511 = vld [vmem:[%s224 + $0x388] sm:$0xff]
        %v512 = vld [vmem:[%s224 + $0x390] sm:$0xff]
        %v513 = vld [vmem:[%s224 + $0x398] sm:$0xff]
        %v514 = vld [vmem:[%s224 + $0x3a0] sm:$0xff]
        %v515 = vld [vmem:[%s224 + $0x3a8] sm:$0xff]
        %v516 = vld [vmem:[%s224 + $0x3b0] sm:$0xff]
        %v517 = vld [vmem:[%s224 + $0x3b8] sm:$0xff]
        %v518 = vld [vmem:[%s224 + $0x3c0] sm:$0xff]
        %v519 = vld [vmem:[%s224 + $0x3c8] sm:$0xff]
        %v520 = vld [vmem:[%s224 + $0x3d0] sm:$0xff]
        %v521 = vld [vmem:[%s224 + $0x3d8] sm:$0xff]
        %v522 = vld [vmem:[%s224 + $0x3e0] sm:$0xff]
        %v523 = vld [vmem:[%s224 + $0x3e8] sm:$0xff]
        %v524 = vld [vmem:[%s224 + $0x3f0] sm:$0xff]
        %v525 = vld [vmem:[%s224 + $0x3f8] sm:$0xff]
        %v526 = vld [vmem:[%s233] sm:$0xff]
        %v527 = vld [vmem:[%s233 + $0x8] sm:$0xff]
        %v528 = vld [vmem:[%s233 + $0x10] sm:$0xff]
        %v529 = vld [vmem:[%s233 + $0x18] sm:$0xff]
        %v530 = vld [vmem:[%s233 + $0x20] sm:$0xff]
        %v531 = vld [vmem:[%s233 + $0x28] sm:$0xff]
        %v532 = vld [vmem:[%s233 + $0x30] sm:$0xff]
        %v533 = vld [vmem:[%s233 + $0x38] sm:$0xff]
        %v534 = vld [vmem:[%s233 + $0x40] sm:$0xff]
        %v535 = vld [vmem:[%s233 + $0x48] sm:$0xff]
        %v536 = vld [vmem:[%s233 + $0x50] sm:$0xff]
        %v537 = vld [vmem:[%s233 + $0x58] sm:$0xff]
        %v538 = vld [vmem:[%s233 + $0x60] sm:$0xff]
        %v539 = vld [vmem:[%s233 + $0x68] sm:$0xff]
        %v540 = vld [vmem:[%s233 + $0x70] sm:$0xff]
        %v541 = vld [vmem:[%s233 + $0x78] sm:$0xff]
        %v542 = vld [vmem:[%s233 + $0x80] sm:$0xff]
        %v543 = vld [vmem:[%s233 + $0x88] sm:$0xff]
        %v544 = vld [vmem:[%s233 + $0x90] sm:$0xff]
        %v545 = vld [vmem:[%s233 + $0x98] sm:$0xff]
        %v546 = vld [vmem:[%s233 + $0xa0] sm:$0xff]
        %v547 = vld [vmem:[%s233 + $0xa8] sm:$0xff]
        %v548 = vld [vmem:[%s233 + $0xb0] sm:$0xff]
        %v549 = vld [vmem:[%s233 + $0xb8] sm:$0xff]
        %v550 = vld [vmem:[%s233 + $0xc0] sm:$0xff]
        %v551 = vld [vmem:[%s233 + $0xc8] sm:$0xff]
        %v552 = vld [vmem:[%s233 + $0xd0] sm:$0xff]
        %v553 = vld [vmem:[%s233 + $0xd8] sm:$0xff]
        %v554 = vld [vmem:[%s233 + $0xe0] sm:$0xff]
        %v555 = vld [vmem:[%s233 + $0xe8] sm:$0xff]
        %v556 = vld [vmem:[%s233 + $0xf0] sm:$0xff]
        %v557 = vld [vmem:[%s233 + $0xf8] sm:$0xff]
        %v558 = vld [vmem:[%s233 + $0x100] sm:$0xff]
        %v559 = vld [vmem:[%s233 + $0x108] sm:$0xff]
        %v560 = vld [vmem:[%s233 + $0x110] sm:$0xff]
        %v561 = vld [vmem:[%s233 + $0x118] sm:$0xff]
        %v562 = vld [vmem:[%s233 + $0x120] sm:$0xff]
        %v563 = vld [vmem:[%s233 + $0x128] sm:$0xff]
        %v564 = vld [vmem:[%s233 + $0x130] sm:$0xff]
        %v565 = vld [vmem:[%s233 + $0x138] sm:$0xff]
        %v566 = vld [vmem:[%s233 + $0x140] sm:$0xff]
        %v567 = vld [vmem:[%s233 + $0x148] sm:$0xff]
        %v568 = vld [vmem:[%s233 + $0x150] sm:$0xff]
        %v569 = vld [vmem:[%s233 + $0x158] sm:$0xff]
        %v570 = vld [vmem:[%s233 + $0x160] sm:$0xff]
        %v571 = vld [vmem:[%s233 + $0x168] sm:$0xff]
        %v572 = vld [vmem:[%s233 + $0x170] sm:$0xff]
        %v573 = vld [vmem:[%s233 + $0x178] sm:$0xff]
        %v574 = vld [vmem:[%s233 + $0x180] sm:$0xff]
        %v575 = vld [vmem:[%s233 + $0x188] sm:$0xff]
        %v576 = vld [vmem:[%s233 + $0x190] sm:$0xff]
        %v577 = vld [vmem:[%s233 + $0x198] sm:$0xff]
        %v578 = vld [vmem:[%s233 + $0x1a0] sm:$0xff]
        %v579 = vld [vmem:[%s233 + $0x1a8] sm:$0xff]
        %v580 = vld [vmem:[%s233 + $0x1b0] sm:$0xff]
        %v581 = vld [vmem:[%s233 + $0x1b8] sm:$0xff]
        %v582 = vld [vmem:[%s233 + $0x1c0] sm:$0xff]
        %v583 = vld [vmem:[%s233 + $0x1c8] sm:$0xff]
        %v584 = vld [vmem:[%s233 + $0x1d0] sm:$0xff]
        %v585 = vld [vmem:[%s233 + $0x1d8] sm:$0xff]
        %v586 = vld [vmem:[%s233 + $0x1e0] sm:$0xff]
        %v587 = vld [vmem:[%s233 + $0x1e8] sm:$0xff]
        %v588 = vld [vmem:[%s233 + $0x1f0] sm:$0xff]
        %v589 = vld [vmem:[%s233 + $0x1f8] sm:$0xff]
        %v590 = vld [vmem:[%s233 + $0x200] sm:$0xff]
        %v591 = vld [vmem:[%s233 + $0x208] sm:$0xff]
        %v592 = vld [vmem:[%s233 + $0x210] sm:$0xff]
        %v593 = vld [vmem:[%s233 + $0x218] sm:$0xff]
        %v594 = vld [vmem:[%s233 + $0x220] sm:$0xff]
        %v595 = vld [vmem:[%s233 + $0x228] sm:$0xff]
        %v596 = vld [vmem:[%s233 + $0x230] sm:$0xff]
        %v597 = vld [vmem:[%s233 + $0x238] sm:$0xff]
        %v598 = vld [vmem:[%s233 + $0x240] sm:$0xff]
        %v599 = vld [vmem:[%s233 + $0x248] sm:$0xff]
        %v600 = vld [vmem:[%s233 + $0x250] sm:$0xff]
        %v601 = vld [vmem:[%s233 + $0x258] sm:$0xff]
        %v602 = vld [vmem:[%s233 + $0x260] sm:$0xff]
        %v603 = vld [vmem:[%s233 + $0x268] sm:$0xff]
        %v604 = vld [vmem:[%s233 + $0x270] sm:$0xff]
        %v605 = vld [vmem:[%s233 + $0x278] sm:$0xff]
        %v606 = vld [vmem:[%s233 + $0x280] sm:$0xff]
        %v607 = vld [vmem:[%s233 + $0x288] sm:$0xff]
        %v608 = vld [vmem:[%s233 + $0x290] sm:$0xff]
        %v609 = vld [vmem:[%s233 + $0x298] sm:$0xff]
        %v610 = vld [vmem:[%s233 + $0x2a0] sm:$0xff]
        %v611 = vld [vmem:[%s233 + $0x2a8] sm:$0xff]
        %v612 = vld [vmem:[%s233 + $0x2b0] sm:$0xff]
        %v613 = vld [vmem:[%s233 + $0x2b8] sm:$0xff]
        %v614 = vld [vmem:[%s233 + $0x2c0] sm:$0xff]
        %v615 = vld [vmem:[%s233 + $0x2c8] sm:$0xff]
        %v616 = vld [vmem:[%s233 + $0x2d0] sm:$0xff]
        %v617 = vld [vmem:[%s233 + $0x2d8] sm:$0xff]
        %v618 = vld [vmem:[%s233 + $0x2e0] sm:$0xff]
        %v619 = vld [vmem:[%s233 + $0x2e8] sm:$0xff]
        %v620 = vld [vmem:[%s233 + $0x2f0] sm:$0xff]
        %v621 = vld [vmem:[%s233 + $0x2f8] sm:$0xff]
        %v622 = vld [vmem:[%s233 + $0x300] sm:$0xff]
        %v623 = vld [vmem:[%s233 + $0x308] sm:$0xff]
        %v624 = vld [vmem:[%s233 + $0x310] sm:$0xff]
        %v625 = vld [vmem:[%s233 + $0x318] sm:$0xff]
        %v626 = vld [vmem:[%s233 + $0x320] sm:$0xff]
        %v627 = vld [vmem:[%s233 + $0x328] sm:$0xff]
        %v628 = vld [vmem:[%s233 + $0x330] sm:$0xff]
        %v629 = vld [vmem:[%s233 + $0x338] sm:$0xff]
        %v630 = vld [vmem:[%s233 + $0x340] sm:$0xff]
        %v631 = vld [vmem:[%s233 + $0x348] sm:$0xff]
        %v632 = vld [vmem:[%s233 + $0x350] sm:$0xff]
        %v633 = vld [vmem:[%s233 + $0x358] sm:$0xff]
        %v634 = vld [vmem:[%s233 + $0x360] sm:$0xff]
        %v635 = vld [vmem:[%s233 + $0x368] sm:$0xff]
        %v636 = vld [vmem:[%s233 + $0x370] sm:$0xff]
        %v637 = vld [vmem:[%s233 + $0x378] sm:$0xff]
        %v638 = vld [vmem:[%s233 + $0x380] sm:$0xff]
        %v639 = vld [vmem:[%s233 + $0x388] sm:$0xff]
        %v640 = vld [vmem:[%s233 + $0x390] sm:$0xff]
        %v641 = vld [vmem:[%s233 + $0x398] sm:$0xff]
        %v642 = vld [vmem:[%s233 + $0x3a0] sm:$0xff]
        %v643 = vld [vmem:[%s233 + $0x3a8] sm:$0xff]
        %v644 = vld [vmem:[%s233 + $0x3b0] sm:$0xff]
        %v645 = vld [vmem:[%s233 + $0x3b8] sm:$0xff]
        %v646 = vld [vmem:[%s233 + $0x3c0] sm:$0xff]
        %v647 = vld [vmem:[%s233 + $0x3c8] sm:$0xff]
        %v648 = vld [vmem:[%s233 + $0x3d0] sm:$0xff]
        %v649 = vld [vmem:[%s233 + $0x3d8] sm:$0xff]
        %v650 = vld [vmem:[%s233 + $0x3e0] sm:$0xff]
        %v651 = vld [vmem:[%s233 + $0x3e8] sm:$0xff]
        %v652 = vld [vmem:[%s233 + $0x3f0] sm:$0xff]
        %v653 = vld [vmem:[%s233 + $0x3f8] sm:$0xff]
        %v654 = vsub.f32 %v270, %v398
        %v655 = vsub.f32 %v271, %v399
        %v656 = vsub.f32 %v272, %v400
        %v657 = vsub.f32 %v273, %v401
        %v658 = vsub.f32 %v274, %v402
        %v659 = vsub.f32 %v275, %v403
        %v660 = vsub.f32 %v276, %v404
        %v661 = vsub.f32 %v277, %v405
        %v662 = vsub.f32 %v278, %v406
        %v663 = vsub.f32 %v279, %v407
        %v664 = vsub.f32 %v280, %v408
        %v665 = vsub.f32 %v281, %v409
        %v666 = vsub.f32 %v282, %v410
        %v667 = vsub.f32 %v283, %v411
        %v668 = vsub.f32 %v284, %v412
        %v669 = vsub.f32 %v285, %v413
        %v670 = vsub.f32 %v286, %v414
        %v671 = vsub.f32 %v287, %v415
        %v672 = vsub.f32 %v288, %v416
        %v673 = vsub.f32 %v289, %v417
        %v674 = vsub.f32 %v290, %v418
        %v675 = vsub.f32 %v291, %v419
        %v676 = vsub.f32 %v292, %v420
        %v677 = vsub.f32 %v293, %v421
        %v678 = vsub.f32 %v294, %v422
        %v679 = vsub.f32 %v295, %v423
        %v680 = vsub.f32 %v296, %v424
        %v681 = vsub.f32 %v297, %v425
        %v682 = vsub.f32 %v298, %v426
        %v683 = vsub.f32 %v299, %v427
        %v684 = vsub.f32 %v300, %v428
        %v685 = vsub.f32 %v301, %v429
        %v686 = vsub.f32 %v302, %v430
        %v687 = vsub.f32 %v303, %v431
        %v688 = vsub.f32 %v304, %v432
        %v689 = vsub.f32 %v305, %v433
        %v690 = vsub.f32 %v306, %v434
        %v691 = vsub.f32 %v307, %v435
        %v692 = vsub.f32 %v308, %v436
        %v693 = vsub.f32 %v309, %v437
        %v694 = vsub.f32 %v310, %v438
        %v695 = vsub.f32 %v311, %v439
        %v696 = vsub.f32 %v312, %v440
        %v697 = vsub.f32 %v313, %v441
        %v698 = vsub.f32 %v314, %v442
        %v699 = vsub.f32 %v315, %v443
        %v700 = vsub.f32 %v316, %v444
        %v701 = vsub.f32 %v317, %v445
        %v702 = vsub.f32 %v318, %v446
        %v703 = vsub.f32 %v319, %v447
        %v704 = vsub.f32 %v320, %v448
        %v705 = vsub.f32 %v321, %v449
        %v706 = vsub.f32 %v322, %v450
        %v707 = vsub.f32 %v323, %v451
        %v708 = vsub.f32 %v324, %v452
        %v709 = vsub.f32 %v325, %v453
        %v710 = vsub.f32 %v326, %v454
        %v711 = vsub.f32 %v327, %v455
        %v712 = vsub.f32 %v328, %v456
        %v713 = vsub.f32 %v329, %v457
        %v714 = vsub.f32 %v330, %v458
        %v715 = vsub.f32 %v331, %v459
        %v716 = vsub.f32 %v332, %v460
        %v717 = vsub.f32 %v333, %v461
        %v718 = vsub.f32 %v334, %v462
        %v719 = vsub.f32 %v335, %v463
        %v720 = vsub.f32 %v336, %v464
        %v721 = vsub.f32 %v337, %v465
        %v722 = vsub.f32 %v338, %v466
        %v723 = vsub.f32 %v339, %v467
        %v724 = vsub.f32 %v340, %v468
        %v725 = vsub.f32 %v341, %v469
        %v726 = vsub.f32 %v342, %v470
        %v727 = vsub.f32 %v343, %v471
        %v728 = vsub.f32 %v344, %v472
        %v729 = vsub.f32 %v345, %v473
        %v730 = vsub.f32 %v346, %v474
        %v731 = vsub.f32 %v347, %v475
        %v732 = vsub.f32 %v348, %v476
        %v733 = vsub.f32 %v349, %v477
        %v734 = vsub.f32 %v350, %v478
        %v735 = vsub.f32 %v351, %v479
        %v736 = vsub.f32 %v352, %v480
        %v737 = vsub.f32 %v353, %v481
        %v738 = vsub.f32 %v354, %v482
        %v739 = vsub.f32 %v355, %v483
        %v740 = vsub.f32 %v356, %v484
        %v741 = vsub.f32 %v357, %v485
        %v742 = vsub.f32 %v358, %v486
        %v743 = vsub.f32 %v359, %v487
        %v744 = vsub.f32 %v360, %v488
        %v745 = vsub.f32 %v361, %v489
        %v746 = vsub.f32 %v362, %v490
        %v747 = vsub.f32 %v363, %v491
        %v748 = vsub.f32 %v364, %v492
        %v749 = vsub.f32 %v365, %v493
        %v750 = vsub.f32 %v366, %v494
        %v751 = vsub.f32 %v367, %v495
        %v752 = vsub.f32 %v368, %v496
        %v753 = vsub.f32 %v369, %v497
        %v754 = vsub.f32 %v370, %v498
        %v755 = vsub.f32 %v371, %v499
        %v756 = vsub.f32 %v372, %v500
        %v757 = vsub.f32 %v373, %v501
        %v758 = vsub.f32 %v374, %v502
        %v759 = vsub.f32 %v375, %v503
        %v760 = vsub.f32 %v376, %v504
        %v761 = vsub.f32 %v377, %v505
        %v762 = vsub.f32 %v378, %v506
        %v763 = vsub.f32 %v379, %v507
        %v764 = vsub.f32 %v380, %v508
        %v765 = vsub.f32 %v381, %v509
        %v766 = vsub.f32 %v382, %v510
        %v767 = vsub.f32 %v383, %v511
        %v768 = vsub.f32 %v384, %v512
        %v769 = vsub.f32 %v385, %v513
        %v770 = vsub.f32 %v386, %v514
        %v771 = vsub.f32 %v387, %v515
        %v772 = vsub.f32 %v388, %v516
        %v773 = vsub.f32 %v389, %v517
        %v774 = vsub.f32 %v390, %v518
        %v775 = vsub.f32 %v391, %v519
        %v776 = vsub.f32 %v392, %v520
        %v777 = vsub.f32 %v393, %v521
        %v778 = vsub.f32 %v394, %v522
        %v779 = vsub.f32 %v395, %v523
        %v780 = vsub.f32 %v396, %v524
        %v781 = vsub.f32 %v397, %v525
        %v782 = vsub.f32 %v270, %v526
        %v783 = vsub.f32 %v271, %v527
        %v784 = vsub.f32 %v272, %v528
        %v785 = vsub.f32 %v273, %v529
        %v786 = vsub.f32 %v274, %v530
        %v787 = vsub.f32 %v275, %v531
        %v788 = vsub.f32 %v276, %v532
        %v789 = vsub.f32 %v277, %v533
        %v790 = vsub.f32 %v278, %v534
        %v791 = vsub.f32 %v279, %v535
        %v792 = vsub.f32 %v280, %v536
        %v793 = vsub.f32 %v281, %v537
        %v794 = vsub.f32 %v282, %v538
        %v795 = vsub.f32 %v283, %v539
        %v796 = vsub.f32 %v284, %v540
        %v797 = vsub.f32 %v285, %v541
        %v798 = vsub.f32 %v286, %v542
        %v799 = vsub.f32 %v287, %v543
        %v800 = vsub.f32 %v288, %v544
        %v801 = vsub.f32 %v289, %v545
        %v802 = vsub.f32 %v290, %v546
        %v803 = vsub.f32 %v291, %v547
        %v804 = vsub.f32 %v292, %v548
        %v805 = vsub.f32 %v293, %v549
        %v806 = vsub.f32 %v294, %v550
        %v807 = vsub.f32 %v295, %v551
        %v808 = vsub.f32 %v296, %v552
        %v809 = vsub.f32 %v297, %v553
        %v810 = vsub.f32 %v298, %v554
        %v811 = vsub.f32 %v299, %v555
        %v812 = vsub.f32 %v300, %v556
        %v813 = vsub.f32 %v301, %v557
        %v814 = vsub.f32 %v302, %v558
        %v815 = vsub.f32 %v303, %v559
        %v816 = vsub.f32 %v304, %v560
        %v817 = vsub.f32 %v305, %v561
        %v818 = vsub.f32 %v306, %v562
        %v819 = vsub.f32 %v307, %v563
        %v820 = vsub.f32 %v308, %v564
        %v821 = vsub.f32 %v309, %v565
        %v822 = vsub.f32 %v310, %v566
        %v823 = vsub.f32 %v311, %v567
        %v824 = vsub.f32 %v312, %v568
        %v825 = vsub.f32 %v313, %v569
        %v826 = vsub.f32 %v314, %v570
        %v827 = vsub.f32 %v315, %v571
        %v828 = vsub.f32 %v316, %v572
        %v829 = vsub.f32 %v317, %v573
        %v830 = vsub.f32 %v318, %v574
        %v831 = vsub.f32 %v319, %v575
        %v832 = vsub.f32 %v320, %v576
        %v833 = vsub.f32 %v321, %v577
        %v834 = vsub.f32 %v322, %v578
        %v835 = vsub.f32 %v323, %v579
        %v836 = vsub.f32 %v324, %v580
        %v837 = vsub.f32 %v325, %v581
        %v838 = vsub.f32 %v326, %v582
        %v839 = vsub.f32 %v327, %v583
        %v840 = vsub.f32 %v328, %v584
        %v841 = vsub.f32 %v329, %v585
        %v842 = vsub.f32 %v330, %v586
        %v843 = vsub.f32 %v331, %v587
        %v844 = vsub.f32 %v332, %v588
        %v845 = vsub.f32 %v333, %v589
        %v846 = vsub.f32 %v334, %v590
        %v847 = vsub.f32 %v335, %v591
        %v848 = vsub.f32 %v336, %v592
        %v849 = vsub.f32 %v337, %v593
        %v850 = vsub.f32 %v338, %v594
        %v851 = vsub.f32 %v339, %v595
        %v852 = vsub.f32 %v340, %v596
        %v853 = vsub.f32 %v341, %v597
        %v854 = vsub.f32 %v342, %v598
        %v855 = vsub.f32 %v343, %v599
        %v856 = vsub.f32 %v344, %v600
        %v857 = vsub.f32 %v345, %v601
        %v858 = vsub.f32 %v346, %v602
        %v859 = vsub.f32 %v347, %v603
        %v860 = vsub.f32 %v348, %v604
        %v861 = vsub.f32 %v349, %v605
        %v862 = vsub.f32 %v350, %v606
        %v863 = vsub.f32 %v351, %v607
        %v864 = vsub.f32 %v352, %v608
        %v865 = vsub.f32 %v353, %v609
        %v866 = vsub.f32 %v354, %v610
        %v867 = vsub.f32 %v355, %v611
        %v868 = vsub.f32 %v356, %v612
        %v869 = vsub.f32 %v357, %v613
        %v870 = vsub.f32 %v358, %v614
        %v871 = vsub.f32 %v359, %v615
        %v872 = vsub.f32 %v360, %v616
        %v873 = vsub.f32 %v361, %v617
        %v874 = vsub.f32 %v362, %v618
        %v875 = vsub.f32 %v363, %v619
        %v876 = vsub.f32 %v364, %v620
        %v877 = vsub.f32 %v365, %v621
        %v878 = vsub.f32 %v366, %v622
        %v879 = vsub.f32 %v367, %v623
        %v880 = vsub.f32 %v368, %v624
        %v881 = vsub.f32 %v369, %v625
        %v882 = vsub.f32 %v370, %v626
        %v883 = vsub.f32 %v371, %v627
        %v884 = vsub.f32 %v372, %v628
        %v885 = vsub.f32 %v373, %v629
        %v886 = vsub.f32 %v374, %v630
        %v887 = vsub.f32 %v375, %v631
        %v888 = vsub.f32 %v376, %v632
        %v889 = vsub.f32 %v377, %v633
        %v890 = vsub.f32 %v378, %v634
        %v891 = vsub.f32 %v379, %v635
        %v892 = vsub.f32 %v380, %v636
        %v893 = vsub.f32 %v381, %v637
        %v894 = vsub.f32 %v382, %v638
        %v895 = vsub.f32 %v383, %v639
        %v896 = vsub.f32 %v384, %v640
        %v897 = vsub.f32 %v385, %v641
        %v898 = vsub.f32 %v386, %v642
        %v899 = vsub.f32 %v387, %v643
        %v900 = vsub.f32 %v388, %v644
        %v901 = vsub.f32 %v389, %v645
        %v902 = vsub.f32 %v390, %v646
        %v903 = vsub.f32 %v391, %v647
        %v904 = vsub.f32 %v392, %v648
        %v905 = vsub.f32 %v393, %v649
        %v906 = vsub.f32 %v394, %v650
        %v907 = vsub.f32 %v395, %v651
        %v908 = vsub.f32 %v396, %v652
        %v909 = vsub.f32 %v397, %v653
        %v910 = vmul.f32 %v654, %v654
        %v911 = vmul.f32 %v655, %v655
        %v912 = vmul.f32 %v656, %v656
        %v913 = vmul.f32 %v657, %v657
        %v914 = vmul.f32 %v658, %v658
        %v915 = vmul.f32 %v659, %v659
        %v916 = vmul.f32 %v660, %v660
        %v917 = vmul.f32 %v661, %v661
        %v918 = vmul.f32 %v662, %v662
        %v919 = vmul.f32 %v663, %v663
        %v920 = vmul.f32 %v664, %v664
        %v921 = vmul.f32 %v665, %v665
        %v922 = vmul.f32 %v666, %v666
        %v923 = vmul.f32 %v667, %v667
        %v924 = vmul.f32 %v668, %v668
        %v925 = vmul.f32 %v669, %v669
        %v926 = vmul.f32 %v670, %v670
        %v927 = vmul.f32 %v671, %v671
        %v928 = vmul.f32 %v672, %v672
        %v929 = vmul.f32 %v673, %v673
        %v930 = vmul.f32 %v674, %v674
        %v931 = vmul.f32 %v675, %v675
        %v932 = vmul.f32 %v676, %v676
        %v933 = vmul.f32 %v677, %v677
        %v934 = vmul.f32 %v678, %v678
        %v935 = vmul.f32 %v679, %v679
        %v936 = vmul.f32 %v680, %v680
        %v937 = vmul.f32 %v681, %v681
        %v938 = vmul.f32 %v682, %v682
        %v939 = vmul.f32 %v683, %v683
        %v940 = vmul.f32 %v684, %v684
        %v941 = vmul.f32 %v685, %v685
        %v942 = vmul.f32 %v686, %v686
        %v943 = vmul.f32 %v687, %v687
        %v944 = vmul.f32 %v688, %v688
        %v945 = vmul.f32 %v689, %v689
        %v946 = vmul.f32 %v690, %v690
        %v947 = vmul.f32 %v691, %v691
        %v948 = vmul.f32 %v692, %v692
        %v949 = vmul.f32 %v693, %v693
        %v950 = vmul.f32 %v694, %v694
        %v951 = vmul.f32 %v695, %v695
        %v952 = vmul.f32 %v696, %v696
        %v953 = vmul.f32 %v697, %v697
        %v954 = vmul.f32 %v698, %v698
        %v955 = vmul.f32 %v699, %v699
        %v956 = vmul.f32 %v700, %v700
        %v957 = vmul.f32 %v701, %v701
        %v958 = vmul.f32 %v702, %v702
        %v959 = vmul.f32 %v703, %v703
        %v960 = vmul.f32 %v704, %v704
        %v961 = vmul.f32 %v705, %v705
        %v962 = vmul.f32 %v706, %v706
        %v963 = vmul.f32 %v707, %v707
        %v964 = vmul.f32 %v708, %v708
        %v965 = vmul.f32 %v709, %v709
        %v966 = vmul.f32 %v710, %v710
        %v967 = vmul.f32 %v711, %v711
        %v968 = vmul.f32 %v712, %v712
        %v969 = vmul.f32 %v713, %v713
        %v970 = vmul.f32 %v714, %v714
        %v971 = vmul.f32 %v715, %v715
        %v972 = vmul.f32 %v716, %v716
        %v973 = vmul.f32 %v717, %v717
        %v974 = vmul.f32 %v718, %v718
        %v975 = vmul.f32 %v719, %v719
        %v976 = vmul.f32 %v720, %v720
        %v977 = vmul.f32 %v721, %v721
        %v978 = vmul.f32 %v722, %v722
        %v979 = vmul.f32 %v723, %v723
        %v980 = vmul.f32 %v724, %v724
        %v981 = vmul.f32 %v725, %v725
        %v982 = vmul.f32 %v726, %v726
        %v983 = vmul.f32 %v727, %v727
        %v984 = vmul.f32 %v728, %v728
        %v985 = vmul.f32 %v729, %v729
        %v986 = vmul.f32 %v730, %v730
        %v987 = vmul.f32 %v731, %v731
        %v988 = vmul.f32 %v732, %v732
        %v989 = vmul.f32 %v733, %v733
        %v990 = vmul.f32 %v734, %v734
        %v991 = vmul.f32 %v735, %v735
        %v992 = vmul.f32 %v736, %v736
        %v993 = vmul.f32 %v737, %v737
        %v994 = vmul.f32 %v738, %v738
        %v995 = vmul.f32 %v739, %v739
        %v996 = vmul.f32 %v740, %v740
        %v997 = vmul.f32 %v741, %v741
        %v998 = vmul.f32 %v742, %v742
        %v999 = vmul.f32 %v743, %v743
        %v1000 = vmul.f32 %v744, %v744
        %v1001 = vmul.f32 %v745, %v745
        %v1002 = vmul.f32 %v746, %v746
        %v1003 = vmul.f32 %v747, %v747
        %v1004 = vmul.f32 %v748, %v748
        %v1005 = vmul.f32 %v749, %v749
        %v1006 = vmul.f32 %v750, %v750
        %v1007 = vmul.f32 %v751, %v751
        %v1008 = vmul.f32 %v752, %v752
        %v1009 = vmul.f32 %v753, %v753
        %v1010 = vmul.f32 %v754, %v754
        %v1011 = vmul.f32 %v755, %v755
        %v1012 = vmul.f32 %v756, %v756
        %v1013 = vmul.f32 %v757, %v757
        %v1014 = vmul.f32 %v758, %v758
        %v1015 = vmul.f32 %v759, %v759
        %v1016 = vmul.f32 %v760, %v760
        %v1017 = vmul.f32 %v761, %v761
        %v1018 = vmul.f32 %v762, %v762
        %v1019 = vmul.f32 %v763, %v763
        %v1020 = vmul.f32 %v764, %v764
        %v1021 = vmul.f32 %v765, %v765
        %v1022 = vmul.f32 %v766, %v766
        %v1023 = vmul.f32 %v767, %v767
        %v1024 = vmul.f32 %v768, %v768
        %v1025 = vmul.f32 %v769, %v769
        %v1026 = vmul.f32 %v770, %v770
        %v1027 = vmul.f32 %v771, %v771
        %v1028 = vmul.f32 %v772, %v772
        %v1029 = vmul.f32 %v773, %v773
        %v1030 = vmul.f32 %v774, %v774
        %v1031 = vmul.f32 %v775, %v775
        %v1032 = vmul.f32 %v776, %v776
        %v1033 = vmul.f32 %v777, %v777
        %v1034 = vmul.f32 %v778, %v778
        %v1035 = vmul.f32 %v779, %v779
        %v1036 = vmul.f32 %v780, %v780
        %v1037 = vmul.f32 %v781, %v781
        %v1038 = vadd.f32 %v910, %v926
        %v1039 = vadd.f32 %v1038, %v942
        %v1040 = vadd.f32 %v1039, %v958
        %v1041 = vadd.f32 %v1040, %v974
        %v1042 = vadd.f32 %v1041, %v990
        %v1043 = vadd.f32 %v1042, %v1006
        %v1044 = vadd.f32 %v1043, %v1022
        %v1045 = vrot.slane %v1044, 4
        %v1046 = vadd.f32 %v1044, %v1045
        %v1047 = vrot.slane %v1046, 2
        %v1048 = vadd.f32 %v1046, %v1047
        %v1049 = vrot.slane %v1048, 1
        %v1050 = vadd.f32 %v1048, %v1049
        %v1051 = vadd.f32 %v911, %v927
        %v1052 = vadd.f32 %v1051, %v943
        %v1053 = vadd.f32 %v1052, %v959
        %v1054 = vadd.f32 %v1053, %v975
        %v1055 = vadd.f32 %v1054, %v991
        %v1056 = vadd.f32 %v1055, %v1007
        %v1057 = vadd.f32 %v1056, %v1023
        %v1058 = vrot.slane %v1057, 4
        %v1059 = vadd.f32 %v1057, %v1058
        %v1060 = vrot.slane %v1059, 2
        %v1061 = vadd.f32 %v1059, %v1060
        %v1062 = vrot.slane %v1061, 1
        %v1063 = vadd.f32 %v1061, %v1062
        %v1064 = vadd.f32 %v912, %v928
        %v1065 = vadd.f32 %v1064, %v944
        %v1066 = vadd.f32 %v1065, %v960
        %v1067 = vadd.f32 %v1066, %v976
        %v1068 = vadd.f32 %v1067, %v992
        %v1069 = vadd.f32 %v1068, %v1008
        %v1070 = vadd.f32 %v1069, %v1024
        %v1071 = vrot.slane %v1070, 4
        %v1072 = vadd.f32 %v1070, %v1071
        %v1073 = vrot.slane %v1072, 2
        %v1074 = vadd.f32 %v1072, %v1073
        %v1075 = vrot.slane %v1074, 1
        %v1076 = vadd.f32 %v1074, %v1075
        %v1077 = vadd.f32 %v913, %v929
        %v1078 = vadd.f32 %v1077, %v945
        %v1079 = vadd.f32 %v1078, %v961
        %v1080 = vadd.f32 %v1079, %v977
        %v1081 = vadd.f32 %v1080, %v993
        %v1082 = vadd.f32 %v1081, %v1009
        %v1083 = vadd.f32 %v1082, %v1025
        %v1084 = vrot.slane %v1083, 4
        %v1085 = vadd.f32 %v1083, %v1084
        %v1086 = vrot.slane %v1085, 2
        %v1087 = vadd.f32 %v1085, %v1086
        %v1088 = vrot.slane %v1087, 1
        %v1089 = vadd.f32 %v1087, %v1088
        %v1090 = vadd.f32 %v914, %v930
        %v1091 = vadd.f32 %v1090, %v946
        %v1092 = vadd.f32 %v1091, %v962
        %v1093 = vadd.f32 %v1092, %v978
        %v1094 = vadd.f32 %v1093, %v994
        %v1095 = vadd.f32 %v1094, %v1010
        %v1096 = vadd.f32 %v1095, %v1026
        %v1097 = vrot.slane %v1096, 4
        %v1098 = vadd.f32 %v1096, %v1097
        %v1099 = vrot.slane %v1098, 2
        %v1100 = vadd.f32 %v1098, %v1099
        %v1101 = vrot.slane %v1100, 1
        %v1102 = vadd.f32 %v1100, %v1101
        %v1103 = vadd.f32 %v915, %v931
        %v1104 = vadd.f32 %v1103, %v947
        %v1105 = vadd.f32 %v1104, %v963
        %v1106 = vadd.f32 %v1105, %v979
        %v1107 = vadd.f32 %v1106, %v995
        %v1108 = vadd.f32 %v1107, %v1011
        %v1109 = vadd.f32 %v1108, %v1027
        %v1110 = vrot.slane %v1109, 4
        %v1111 = vadd.f32 %v1109, %v1110
        %v1112 = vrot.slane %v1111, 2
        %v1113 = vadd.f32 %v1111, %v1112
        %v1114 = vrot.slane %v1113, 1
        %v1115 = vadd.f32 %v1113, %v1114
        %v1116 = vadd.f32 %v916, %v932
        %v1117 = vadd.f32 %v1116, %v948
        %v1118 = vadd.f32 %v1117, %v964
        %v1119 = vadd.f32 %v1118, %v980
        %v1120 = vadd.f32 %v1119, %v996
        %v1121 = vadd.f32 %v1120, %v1012
        %v1122 = vadd.f32 %v1121, %v1028
        %v1123 = vrot.slane %v1122, 4
        %v1124 = vadd.f32 %v1122, %v1123
        %v1125 = vrot.slane %v1124, 2
        %v1126 = vadd.f32 %v1124, %v1125
        %v1127 = vrot.slane %v1126, 1
        %v1128 = vadd.f32 %v1126, %v1127
        %v1129 = vadd.f32 %v917, %v933
        %v1130 = vadd.f32 %v1129, %v949
        %v1131 = vadd.f32 %v1130, %v965
        %v1132 = vadd.f32 %v1131, %v981
        %v1133 = vadd.f32 %v1132, %v997
        %v1134 = vadd.f32 %v1133, %v1013
        %v1135 = vadd.f32 %v1134, %v1029
        %v1136 = vrot.slane %v1135, 4
        %v1137 = vadd.f32 %v1135, %v1136
        %v1138 = vrot.slane %v1137, 2
        %v1139 = vadd.f32 %v1137, %v1138
        %v1140 = vrot.slane %v1139, 1
        %v1141 = vadd.f32 %v1139, %v1140
        %v1142 = vadd.f32 %v918, %v934
        %v1143 = vadd.f32 %v1142, %v950
        %v1144 = vadd.f32 %v1143, %v966
        %v1145 = vadd.f32 %v1144, %v982
        %v1146 = vadd.f32 %v1145, %v998
        %v1147 = vadd.f32 %v1146, %v1014
        %v1148 = vadd.f32 %v1147, %v1030
        %v1149 = vrot.slane %v1148, 4
        %v1150 = vadd.f32 %v1148, %v1149
        %v1151 = vrot.slane %v1150, 2
        %v1152 = vadd.f32 %v1150, %v1151
        %v1153 = vrot.slane %v1152, 1
        %v1154 = vadd.f32 %v1152, %v1153
        %v1155 = vadd.f32 %v919, %v935
        %v1156 = vadd.f32 %v1155, %v951
        %v1157 = vadd.f32 %v1156, %v967
        %v1158 = vadd.f32 %v1157, %v983
        %v1159 = vadd.f32 %v1158, %v999
        %v1160 = vadd.f32 %v1159, %v1015
        %v1161 = vadd.f32 %v1160, %v1031
        %v1162 = vrot.slane %v1161, 4
        %v1163 = vadd.f32 %v1161, %v1162
        %v1164 = vrot.slane %v1163, 2
        %v1165 = vadd.f32 %v1163, %v1164
        %v1166 = vrot.slane %v1165, 1
        %v1167 = vadd.f32 %v1165, %v1166
        %v1168 = vadd.f32 %v920, %v936
        %v1169 = vadd.f32 %v1168, %v952
        %v1170 = vadd.f32 %v1169, %v968
        %v1171 = vadd.f32 %v1170, %v984
        %v1172 = vadd.f32 %v1171, %v1000
        %v1173 = vadd.f32 %v1172, %v1016
        %v1174 = vadd.f32 %v1173, %v1032
        %v1175 = vrot.slane %v1174, 4
        %v1176 = vadd.f32 %v1174, %v1175
        %v1177 = vrot.slane %v1176, 2
        %v1178 = vadd.f32 %v1176, %v1177
        %v1179 = vrot.slane %v1178, 1
        %v1180 = vadd.f32 %v1178, %v1179
        %v1181 = vadd.f32 %v921, %v937
        %v1182 = vadd.f32 %v1181, %v953
        %v1183 = vadd.f32 %v1182, %v969
        %v1184 = vadd.f32 %v1183, %v985
        %v1185 = vadd.f32 %v1184, %v1001
        %v1186 = vadd.f32 %v1185, %v1017
        %v1187 = vadd.f32 %v1186, %v1033
        %v1188 = vrot.slane %v1187, 4
        %v1189 = vadd.f32 %v1187, %v1188
        %v1190 = vrot.slane %v1189, 2
        %v1191 = vadd.f32 %v1189, %v1190
        %v1192 = vrot.slane %v1191, 1
        %v1193 = vadd.f32 %v1191, %v1192
        %v1194 = vadd.f32 %v922, %v938
        %v1195 = vadd.f32 %v1194, %v954
        %v1196 = vadd.f32 %v1195, %v970
        %v1197 = vadd.f32 %v1196, %v986
        %v1198 = vadd.f32 %v1197, %v1002
        %v1199 = vadd.f32 %v1198, %v1018
        %v1200 = vadd.f32 %v1199, %v1034
        %v1201 = vrot.slane %v1200, 4
        %v1202 = vadd.f32 %v1200, %v1201
        %v1203 = vrot.slane %v1202, 2
        %v1204 = vadd.f32 %v1202, %v1203
        %v1205 = vrot.slane %v1204, 1
        %v1206 = vadd.f32 %v1204, %v1205
        %v1207 = vadd.f32 %v923, %v939
        %v1208 = vadd.f32 %v1207, %v955
        %v1209 = vadd.f32 %v1208, %v971
        %v1210 = vadd.f32 %v1209, %v987
        %v1211 = vadd.f32 %v1210, %v1003
        %v1212 = vadd.f32 %v1211, %v1019
        %v1213 = vadd.f32 %v1212, %v1035
        %v1214 = vrot.slane %v1213, 4
        %v1215 = vadd.f32 %v1213, %v1214
        %v1216 = vrot.slane %v1215, 2
        %v1217 = vadd.f32 %v1215, %v1216
        %v1218 = vrot.slane %v1217, 1
        %v1219 = vadd.f32 %v1217, %v1218
        %v1220 = vadd.f32 %v924, %v940
        %v1221 = vadd.f32 %v1220, %v956
        %v1222 = vadd.f32 %v1221, %v972
        %v1223 = vadd.f32 %v1222, %v988
        %v1224 = vadd.f32 %v1223, %v1004
        %v1225 = vadd.f32 %v1224, %v1020
        %v1226 = vadd.f32 %v1225, %v1036
        %v1227 = vrot.slane %v1226, 4
        %v1228 = vadd.f32 %v1226, %v1227
        %v1229 = vrot.slane %v1228, 2
        %v1230 = vadd.f32 %v1228, %v1229
        %v1231 = vrot.slane %v1230, 1
        %v1232 = vadd.f32 %v1230, %v1231
        %v1233 = vadd.f32 %v925, %v941
        %v1234 = vadd.f32 %v1233, %v957
        %v1235 = vadd.f32 %v1234, %v973
        %v1236 = vadd.f32 %v1235, %v989
        %v1237 = vadd.f32 %v1236, %v1005
        %v1238 = vadd.f32 %v1237, %v1021
        %v1239 = vadd.f32 %v1238, %v1037
        %v1240 = vrot.slane %v1239, 4
        %v1241 = vadd.f32 %v1239, %v1240
        %v1242 = vrot.slane %v1241, 2
        %v1243 = vadd.f32 %v1241, %v1242
        %v1244 = vrot.slane %v1243, 1
        %v1245 = vadd.f32 %v1243, %v1244
        %v1246 = vrsqrt.pop %v1050
        %v1247 = vmul.f32 %v1050, %v1246
        %vm1248 = vcmp.eq.f32.partialorder %v1050, inf
        %v1249 = vsel %vm1248, %v1050, %v1247
        %vm1250 = vcmp.eq.f32.partialorder %v1050, 0.0
        %v1251 = vand.u32 %v1050, 2147483648
        %v1252 = vsel %vm1250, %v1251, %v1249
        %v1253 = vrsqrt.pop %v1063
        %v1254 = vmul.f32 %v1063, %v1253
        %vm1255 = vcmp.eq.f32.partialorder %v1063, inf
        %v1256 = vsel %vm1255, %v1063, %v1254
        %vm1257 = vcmp.eq.f32.partialorder %v1063, 0.0
        %v1258 = vand.u32 %v1063, 2147483648
        %v1259 = vsel %vm1257, %v1258, %v1256
        %v1260 = vrsqrt.pop %v1076
        %v1261 = vmul.f32 %v1076, %v1260
        %vm1262 = vcmp.eq.f32.partialorder %v1076, inf
        %v1263 = vsel %vm1262, %v1076, %v1261
        %vm1264 = vcmp.eq.f32.partialorder %v1076, 0.0
        %v1265 = vand.u32 %v1076, 2147483648
        %v1266 = vsel %vm1264, %v1265, %v1263
        %v1267 = vrsqrt.pop %v1089
        %v1268 = vmul.f32 %v1089, %v1267
        %vm1269 = vcmp.eq.f32.partialorder %v1089, inf
        %v1270 = vsel %vm1269, %v1089, %v1268
        %vm1271 = vcmp.eq.f32.partialorder %v1089, 0.0
        %v1272 = vand.u32 %v1089, 2147483648
        %v1273 = vsel %vm1271, %v1272, %v1270
        %v1274 = vrsqrt.pop %v1102
        %v1275 = vmul.f32 %v1102, %v1274
        %vm1276 = vcmp.eq.f32.partialorder %v1102, inf
        %v1277 = vsel %vm1276, %v1102, %v1275
        %vm1278 = vcmp.eq.f32.partialorder %v1102, 0.0
        %v1279 = vand.u32 %v1102, 2147483648
        %v1280 = vsel %vm1278, %v1279, %v1277
        %v1281 = vrsqrt.pop %v1115
        %v1282 = vmul.f32 %v1115, %v1281
        %vm1283 = vcmp.eq.f32.partialorder %v1115, inf
        %v1284 = vsel %vm1283, %v1115, %v1282
        %vm1285 = vcmp.eq.f32.partialorder %v1115, 0.0
        %v1286 = vand.u32 %v1115, 2147483648
        %v1287 = vsel %vm1285, %v1286, %v1284
        %v1288 = vrsqrt.pop %v1128
        %v1289 = vmul.f32 %v1128, %v1288
        %vm1290 = vcmp.eq.f32.partialorder %v1128, inf
        %v1291 = vsel %vm1290, %v1128, %v1289
        %vm1292 = vcmp.eq.f32.partialorder %v1128, 0.0
        %v1293 = vand.u32 %v1128, 2147483648
        %v1294 = vsel %vm1292, %v1293, %v1291
        %v1295 = vrsqrt.pop %v1141
        %v1296 = vmul.f32 %v1141, %v1295
        %vm1297 = vcmp.eq.f32.partialorder %v1141, inf
        %v1298 = vsel %vm1297, %v1141, %v1296
        %vm1299 = vcmp.eq.f32.partialorder %v1141, 0.0
        %v1300 = vand.u32 %v1141, 2147483648
        %v1301 = vsel %vm1299, %v1300, %v1298
        %v1302 = vrsqrt.pop %v1154
        %v1303 = vmul.f32 %v1154, %v1302
        %vm1304 = vcmp.eq.f32.partialorder %v1154, inf
        %v1305 = vsel %vm1304, %v1154, %v1303
        %vm1306 = vcmp.eq.f32.partialorder %v1154, 0.0
        %v1307 = vand.u32 %v1154, 2147483648
        %v1308 = vsel %vm1306, %v1307, %v1305
        %v1309 = vrsqrt.pop %v1167
        %v1310 = vmul.f32 %v1167, %v1309
        %vm1311 = vcmp.eq.f32.partialorder %v1167, inf
        %v1312 = vsel %vm1311, %v1167, %v1310
        %vm1313 = vcmp.eq.f32.partialorder %v1167, 0.0
        %v1314 = vand.u32 %v1167, 2147483648
        %v1315 = vsel %vm1313, %v1314, %v1312
        %v1316 = vrsqrt.pop %v1180
        %v1317 = vmul.f32 %v1180, %v1316
        %vm1318 = vcmp.eq.f32.partialorder %v1180, inf
        %v1319 = vsel %vm1318, %v1180, %v1317
        %vm1320 = vcmp.eq.f32.partialorder %v1180, 0.0
        %v1321 = vand.u32 %v1180, 2147483648
        %v1322 = vsel %vm1320, %v1321, %v1319
        %v1323 = vrsqrt.pop %v1193
        %v1324 = vmul.f32 %v1193, %v1323
        %vm1325 = vcmp.eq.f32.partialorder %v1193, inf
        %v1326 = vsel %vm1325, %v1193, %v1324
        %vm1327 = vcmp.eq.f32.partialorder %v1193, 0.0
        %v1328 = vand.u32 %v1193, 2147483648
        %v1329 = vsel %vm1327, %v1328, %v1326
        %v1330 = vrsqrt.pop %v1206
        %v1331 = vmul.f32 %v1206, %v1330
        %vm1332 = vcmp.eq.f32.partialorder %v1206, inf
        %v1333 = vsel %vm1332, %v1206, %v1331
        %vm1334 = vcmp.eq.f32.partialorder %v1206, 0.0
        %v1335 = vand.u32 %v1206, 2147483648
        %v1336 = vsel %vm1334, %v1335, %v1333
        %v1337 = vrsqrt.pop %v1219
        %v1338 = vmul.f32 %v1219, %v1337
        %vm1339 = vcmp.eq.f32.partialorder %v1219, inf
        %v1340 = vsel %vm1339, %v1219, %v1338
        %vm1341 = vcmp.eq.f32.partialorder %v1219, 0.0
        %v1342 = vand.u32 %v1219, 2147483648
        %v1343 = vsel %vm1341, %v1342, %v1340
        %v1344 = vrsqrt.pop %v1232
        %v1345 = vmul.f32 %v1232, %v1344
        %vm1346 = vcmp.eq.f32.partialorder %v1232, inf
        %v1347 = vsel %vm1346, %v1232, %v1345
        %vm1348 = vcmp.eq.f32.partialorder %v1232, 0.0
        %v1349 = vand.u32 %v1232, 2147483648
        %v1350 = vsel %vm1348, %v1349, %v1347
        %v1351 = vrsqrt.pop %v1245
        %v1352 = vmul.f32 %v1245, %v1351
        %vm1353 = vcmp.eq.f32.partialorder %v1245, inf
        %v1354 = vsel %vm1353, %v1245, %v1352
        %vm1355 = vcmp.eq.f32.partialorder %v1245, 0.0
        %v1356 = vand.u32 %v1245, 2147483648
        %v1357 = vsel %vm1355, %v1356, %v1354
        %v1358 = vmul.f32 %v782, %v782
        %v1359 = vmul.f32 %v783, %v783
        %v1360 = vmul.f32 %v784, %v784
        %v1361 = vmul.f32 %v785, %v785
        %v1362 = vmul.f32 %v786, %v786
        %v1363 = vmul.f32 %v787, %v787
        %v1364 = vmul.f32 %v788, %v788
        %v1365 = vmul.f32 %v789, %v789
        %v1366 = vmul.f32 %v790, %v790
        %v1367 = vmul.f32 %v791, %v791
        %v1368 = vmul.f32 %v792, %v792
        %v1369 = vmul.f32 %v793, %v793
        %v1370 = vmul.f32 %v794, %v794
        %v1371 = vmul.f32 %v795, %v795
        %v1372 = vmul.f32 %v796, %v796
        %v1373 = vmul.f32 %v797, %v797
        %v1374 = vmul.f32 %v798, %v798
        %v1375 = vmul.f32 %v799, %v799
        %v1376 = vmul.f32 %v800, %v800
        %v1377 = vmul.f32 %v801, %v801
        %v1378 = vmul.f32 %v802, %v802
        %v1379 = vmul.f32 %v803, %v803
        %v1380 = vmul.f32 %v804, %v804
        %v1381 = vmul.f32 %v805, %v805
        %v1382 = vmul.f32 %v806, %v806
        %v1383 = vmul.f32 %v807, %v807
        %v1384 = vmul.f32 %v808, %v808
        %v1385 = vmul.f32 %v809, %v809
        %v1386 = vmul.f32 %v810, %v810
        %v1387 = vmul.f32 %v811, %v811
        %v1388 = vmul.f32 %v812, %v812
        %v1389 = vmul.f32 %v813, %v813
        %v1390 = vmul.f32 %v814, %v814
        %v1391 = vmul.f32 %v815, %v815
        %v1392 = vmul.f32 %v816, %v816
        %v1393 = vmul.f32 %v817, %v817
        %v1394 = vmul.f32 %v818, %v818
        %v1395 = vmul.f32 %v819, %v819
        %v1396 = vmul.f32 %v820, %v820
        %v1397 = vmul.f32 %v821, %v821
        %v1398 = vmul.f32 %v822, %v822
        %v1399 = vmul.f32 %v823, %v823
        %v1400 = vmul.f32 %v824, %v824
        %v1401 = vmul.f32 %v825, %v825
        %v1402 = vmul.f32 %v826, %v826
        %v1403 = vmul.f32 %v827, %v827
        %v1404 = vmul.f32 %v828, %v828
        %v1405 = vmul.f32 %v829, %v829
        %v1406 = vmul.f32 %v830, %v830
        %v1407 = vmul.f32 %v831, %v831
        %v1408 = vmul.f32 %v832, %v832
        %v1409 = vmul.f32 %v833, %v833
        %v1410 = vmul.f32 %v834, %v834
        %v1411 = vmul.f32 %v835, %v835
        %v1412 = vmul.f32 %v836, %v836
        %v1413 = vmul.f32 %v837, %v837
        %v1414 = vmul.f32 %v838, %v838
        %v1415 = vmul.f32 %v839, %v839
        %v1416 = vmul.f32 %v840, %v840
        %v1417 = vmul.f32 %v841, %v841
        %v1418 = vmul.f32 %v842, %v842
        %v1419 = vmul.f32 %v843, %v843
        %v1420 = vmul.f32 %v844, %v844
        %v1421 = vmul.f32 %v845, %v845
        %v1422 = vmul.f32 %v846, %v846
        %v1423 = vmul.f32 %v847, %v847
        %v1424 = vmul.f32 %v848, %v848
        %v1425 = vmul.f32 %v849, %v849
        %v1426 = vmul.f32 %v850, %v850
        %v1427 = vmul.f32 %v851, %v851
        %v1428 = vmul.f32 %v852, %v852
        %v1429 = vmul.f32 %v853, %v853
        %v1430 = vmul.f32 %v854, %v854
        %v1431 = vmul.f32 %v855, %v855
        %v1432 = vmul.f32 %v856, %v856
        %v1433 = vmul.f32 %v857, %v857
        %v1434 = vmul.f32 %v858, %v858
        %v1435 = vmul.f32 %v859, %v859
        %v1436 = vmul.f32 %v860, %v860
        %v1437 = vmul.f32 %v861, %v861
        %v1438 = vmul.f32 %v862, %v862
        %v1439 = vmul.f32 %v863, %v863
        %v1440 = vmul.f32 %v864, %v864
        %v1441 = vmul.f32 %v865, %v865
        %v1442 = vmul.f32 %v866, %v866
        %v1443 = vmul.f32 %v867, %v867
        %v1444 = vmul.f32 %v868, %v868
        %v1445 = vmul.f32 %v869, %v869
        %v1446 = vmul.f32 %v870, %v870
        %v1447 = vmul.f32 %v871, %v871
        %v1448 = vmul.f32 %v872, %v872
        %v1449 = vmul.f32 %v873, %v873
        %v1450 = vmul.f32 %v874, %v874
        %v1451 = vmul.f32 %v875, %v875
        %v1452 = vmul.f32 %v876, %v876
        %v1453 = vmul.f32 %v877, %v877
        %v1454 = vmul.f32 %v878, %v878
        %v1455 = vmul.f32 %v879, %v879
        %v1456 = vmul.f32 %v880, %v880
        %v1457 = vmul.f32 %v881, %v881
        %v1458 = vmul.f32 %v882, %v882
        %v1459 = vmul.f32 %v883, %v883
        %v1460 = vmul.f32 %v884, %v884
        %v1461 = vmul.f32 %v885, %v885
        %v1462 = vmul.f32 %v886, %v886
        %v1463 = vmul.f32 %v887, %v887
        %v1464 = vmul.f32 %v888, %v888
        %v1465 = vmul.f32 %v889, %v889
        %v1466 = vmul.f32 %v890, %v890
        %v1467 = vmul.f32 %v891, %v891
        %v1468 = vmul.f32 %v892, %v892
        %v1469 = vmul.f32 %v893, %v893
        %v1470 = vmul.f32 %v894, %v894
        %v1471 = vmul.f32 %v895, %v895
        %v1472 = vmul.f32 %v896, %v896
        %v1473 = vmul.f32 %v897, %v897
        %v1474 = vmul.f32 %v898, %v898
        %v1475 = vmul.f32 %v899, %v899
        %v1476 = vmul.f32 %v900, %v900
        %v1477 = vmul.f32 %v901, %v901
        %v1478 = vmul.f32 %v902, %v902
        %v1479 = vmul.f32 %v903, %v903
        %v1480 = vmul.f32 %v904, %v904
        %v1481 = vmul.f32 %v905, %v905
        %v1482 = vmul.f32 %v906, %v906
        %v1483 = vmul.f32 %v907, %v907
        %v1484 = vmul.f32 %v908, %v908
        %v1485 = vmul.f32 %v909, %v909
        %v1486 = vadd.f32 %v1358, %v1374
        %v1487 = vadd.f32 %v1486, %v1390
        %v1488 = vadd.f32 %v1487, %v1406
        %v1489 = vadd.f32 %v1488, %v1422
        %v1490 = vadd.f32 %v1489, %v1438
        %v1491 = vadd.f32 %v1490, %v1454
        %v1492 = vadd.f32 %v1491, %v1470
        %v1493 = vrot.slane %v1492, 4
        %v1494 = vadd.f32 %v1492, %v1493
        %v1495 = vrot.slane %v1494, 2
        %v1496 = vadd.f32 %v1494, %v1495
        %v1497 = vrot.slane %v1496, 1
        %v1498 = vadd.f32 %v1496, %v1497
        %v1499 = vadd.f32 %v1359, %v1375
        %v1500 = vadd.f32 %v1499, %v1391
        %v1501 = vadd.f32 %v1500, %v1407
        %v1502 = vadd.f32 %v1501, %v1423
        %v1503 = vadd.f32 %v1502, %v1439
        %v1504 = vadd.f32 %v1503, %v1455
        %v1505 = vadd.f32 %v1504, %v1471
        %v1506 = vrot.slane %v1505, 4
        %v1507 = vadd.f32 %v1505, %v1506
        %v1508 = vrot.slane %v1507, 2
        %v1509 = vadd.f32 %v1507, %v1508
        %v1510 = vrot.slane %v1509, 1
        %v1511 = vadd.f32 %v1509, %v1510
        %v1512 = vadd.f32 %v1360, %v1376
        %v1513 = vadd.f32 %v1512, %v1392
        %v1514 = vadd.f32 %v1513, %v1408
        %v1515 = vadd.f32 %v1514, %v1424
        %v1516 = vadd.f32 %v1515, %v1440
        %v1517 = vadd.f32 %v1516, %v1456
        %v1518 = vadd.f32 %v1517, %v1472
        %v1519 = vrot.slane %v1518, 4
        %v1520 = vadd.f32 %v1518, %v1519
        %v1521 = vrot.slane %v1520, 2
        %v1522 = vadd.f32 %v1520, %v1521
        %v1523 = vrot.slane %v1522, 1
        %v1524 = vadd.f32 %v1522, %v1523
        %v1525 = vadd.f32 %v1361, %v1377
        %v1526 = vadd.f32 %v1525, %v1393
        %v1527 = vadd.f32 %v1526, %v1409
        %v1528 = vadd.f32 %v1527, %v1425
        %v1529 = vadd.f32 %v1528, %v1441
        %v1530 = vadd.f32 %v1529, %v1457
        %v1531 = vadd.f32 %v1530, %v1473
        %v1532 = vrot.slane %v1531, 4
        %v1533 = vadd.f32 %v1531, %v1532
        %v1534 = vrot.slane %v1533, 2
        %v1535 = vadd.f32 %v1533, %v1534
        %v1536 = vrot.slane %v1535, 1
        %v1537 = vadd.f32 %v1535, %v1536
        %v1538 = vadd.f32 %v1362, %v1378
        %v1539 = vadd.f32 %v1538, %v1394
        %v1540 = vadd.f32 %v1539, %v1410
        %v1541 = vadd.f32 %v1540, %v1426
        %v1542 = vadd.f32 %v1541, %v1442
        %v1543 = vadd.f32 %v1542, %v1458
        %v1544 = vadd.f32 %v1543, %v1474
        %v1545 = vrot.slane %v1544, 4
        %v1546 = vadd.f32 %v1544, %v1545
        %v1547 = vrot.slane %v1546, 2
        %v1548 = vadd.f32 %v1546, %v1547
        %v1549 = vrot.slane %v1548, 1
        %v1550 = vadd.f32 %v1548, %v1549
        %v1551 = vadd.f32 %v1363, %v1379
        %v1552 = vadd.f32 %v1551, %v1395
        %v1553 = vadd.f32 %v1552, %v1411
        %v1554 = vadd.f32 %v1553, %v1427
        %v1555 = vadd.f32 %v1554, %v1443
        %v1556 = vadd.f32 %v1555, %v1459
        %v1557 = vadd.f32 %v1556, %v1475
        %v1558 = vrot.slane %v1557, 4
        %v1559 = vadd.f32 %v1557, %v1558
        %v1560 = vrot.slane %v1559, 2
        %v1561 = vadd.f32 %v1559, %v1560
        %v1562 = vrot.slane %v1561, 1
        %v1563 = vadd.f32 %v1561, %v1562
        %v1564 = vadd.f32 %v1364, %v1380
        %v1565 = vadd.f32 %v1564, %v1396
        %v1566 = vadd.f32 %v1565, %v1412
        %v1567 = vadd.f32 %v1566, %v1428
        %v1568 = vadd.f32 %v1567, %v1444
        %v1569 = vadd.f32 %v1568, %v1460
        %v1570 = vadd.f32 %v1569, %v1476
        %v1571 = vrot.slane %v1570, 4
        %v1572 = vadd.f32 %v1570, %v1571
        %v1573 = vrot.slane %v1572, 2
        %v1574 = vadd.f32 %v1572, %v1573
        %v1575 = vrot.slane %v1574, 1
        %v1576 = vadd.f32 %v1574, %v1575
        %v1577 = vadd.f32 %v1365, %v1381
        %v1578 = vadd.f32 %v1577, %v1397
        %v1579 = vadd.f32 %v1578, %v1413
        %v1580 = vadd.f32 %v1579, %v1429
        %v1581 = vadd.f32 %v1580, %v1445
        %v1582 = vadd.f32 %v1581, %v1461
        %v1583 = vadd.f32 %v1582, %v1477
        %v1584 = vrot.slane %v1583, 4
        %v1585 = vadd.f32 %v1583, %v1584
        %v1586 = vrot.slane %v1585, 2
        %v1587 = vadd.f32 %v1585, %v1586
        %v1588 = vrot.slane %v1587, 1
        %v1589 = vadd.f32 %v1587, %v1588
        %v1590 = vadd.f32 %v1366, %v1382
        %v1591 = vadd.f32 %v1590, %v1398
        %v1592 = vadd.f32 %v1591, %v1414
        %v1593 = vadd.f32 %v1592, %v1430
        %v1594 = vadd.f32 %v1593, %v1446
        %v1595 = vadd.f32 %v1594, %v1462
        %v1596 = vadd.f32 %v1595, %v1478
        %v1597 = vrot.slane %v1596, 4
        %v1598 = vadd.f32 %v1596, %v1597
        %v1599 = vrot.slane %v1598, 2
        %v1600 = vadd.f32 %v1598, %v1599
        %v1601 = vrot.slane %v1600, 1
        %v1602 = vadd.f32 %v1600, %v1601
        %v1603 = vadd.f32 %v1367, %v1383
        %v1604 = vadd.f32 %v1603, %v1399
        %v1605 = vadd.f32 %v1604, %v1415
        %v1606 = vadd.f32 %v1605, %v1431
        %v1607 = vadd.f32 %v1606, %v1447
        %v1608 = vadd.f32 %v1607, %v1463
        %v1609 = vadd.f32 %v1608, %v1479
        %v1610 = vrot.slane %v1609, 4
        %v1611 = vadd.f32 %v1609, %v1610
        %v1612 = vrot.slane %v1611, 2
        %v1613 = vadd.f32 %v1611, %v1612
        %v1614 = vrot.slane %v1613, 1
        %v1615 = vadd.f32 %v1613, %v1614
        %v1616 = vadd.f32 %v1368, %v1384
        %v1617 = vadd.f32 %v1616, %v1400
        %v1618 = vadd.f32 %v1617, %v1416
        %v1619 = vadd.f32 %v1618, %v1432
        %v1620 = vadd.f32 %v1619, %v1448
        %v1621 = vadd.f32 %v1620, %v1464
        %v1622 = vadd.f32 %v1621, %v1480
        %v1623 = vrot.slane %v1622, 4
        %v1624 = vadd.f32 %v1622, %v1623
        %v1625 = vrot.slane %v1624, 2
        %v1626 = vadd.f32 %v1624, %v1625
        %v1627 = vrot.slane %v1626, 1
        %v1628 = vadd.f32 %v1626, %v1627
        %v1629 = vadd.f32 %v1369, %v1385
        %v1630 = vadd.f32 %v1629, %v1401
        %v1631 = vadd.f32 %v1630, %v1417
        %v1632 = vadd.f32 %v1631, %v1433
        %v1633 = vadd.f32 %v1632, %v1449
        %v1634 = vadd.f32 %v1633, %v1465
        %v1635 = vadd.f32 %v1634, %v1481
        %v1636 = vrot.slane %v1635, 4
        %v1637 = vadd.f32 %v1635, %v1636
        %v1638 = vrot.slane %v1637, 2
        %v1639 = vadd.f32 %v1637, %v1638
        %v1640 = vrot.slane %v1639, 1
        %v1641 = vadd.f32 %v1639, %v1640
        %v1642 = vadd.f32 %v1370, %v1386
        %v1643 = vadd.f32 %v1642, %v1402
        %v1644 = vadd.f32 %v1643, %v1418
        %v1645 = vadd.f32 %v1644, %v1434
        %v1646 = vadd.f32 %v1645, %v1450
        %v1647 = vadd.f32 %v1646, %v1466
        %v1648 = vadd.f32 %v1647, %v1482
        %v1649 = vrot.slane %v1648, 4
        %v1650 = vadd.f32 %v1648, %v1649
        %v1651 = vrot.slane %v1650, 2
        %v1652 = vadd.f32 %v1650, %v1651
        %v1653 = vrot.slane %v1652, 1
        %v1654 = vadd.f32 %v1652, %v1653
        %v1655 = vadd.f32 %v1371, %v1387
        %v1656 = vadd.f32 %v1655, %v1403
        %v1657 = vadd.f32 %v1656, %v1419
        %v1658 = vadd.f32 %v1657, %v1435
        %v1659 = vadd.f32 %v1658, %v1451
        %v1660 = vadd.f32 %v1659, %v1467
        %v1661 = vadd.f32 %v1660, %v1483
        %v1662 = vrot.slane %v1661, 4
        %v1663 = vadd.f32 %v1661, %v1662
        %v1664 = vrot.slane %v1663, 2
        %v1665 = vadd.f32 %v1663, %v1664
        %v1666 = vrot.slane %v1665, 1
        %v1667 = vadd.f32 %v1665, %v1666
        %v1668 = vadd.f32 %v1372, %v1388
        %v1669 = vadd.f32 %v1668, %v1404
        %v1670 = vadd.f32 %v1669, %v1420
        %v1671 = vadd.f32 %v1670, %v1436
        %v1672 = vadd.f32 %v1671, %v1452
        %v1673 = vadd.f32 %v1672, %v1468
        %v1674 = vadd.f32 %v1673, %v1484
        %v1675 = vrot.slane %v1674, 4
        %v1676 = vadd.f32 %v1674, %v1675
        %v1677 = vrot.slane %v1676, 2
        %v1678 = vadd.f32 %v1676, %v1677
        %v1679 = vrot.slane %v1678, 1
        %v1680 = vadd.f32 %v1678, %v1679
        %v1681 = vadd.f32 %v1373, %v1389
        %v1682 = vadd.f32 %v1681, %v1405
        %v1683 = vadd.f32 %v1682, %v1421
        %v1684 = vadd.f32 %v1683, %v1437
        %v1685 = vadd.f32 %v1684, %v1453
        %v1686 = vadd.f32 %v1685, %v1469
        %v1687 = vadd.f32 %v1686, %v1485
        %v1688 = vrot.slane %v1687, 4
        %v1689 = vadd.f32 %v1687, %v1688
        %v1690 = vrot.slane %v1689, 2
        %v1691 = vadd.f32 %v1689, %v1690
        %v1692 = vrot.slane %v1691, 1
        %v1693 = vadd.f32 %v1691, %v1692
        %v1694 = vrsqrt.pop %v1498
        %v1695 = vmul.f32 %v1498, %v1694
        %vm1696 = vcmp.eq.f32.partialorder %v1498, inf
        %v1697 = vsel %vm1696, %v1498, %v1695
        %vm1698 = vcmp.eq.f32.partialorder %v1498, 0.0
        %v1699 = vand.u32 %v1498, 2147483648
        %v1700 = vsel %vm1698, %v1699, %v1697
        %v1701 = vrsqrt.pop %v1511
        %v1702 = vmul.f32 %v1511, %v1701
        %vm1703 = vcmp.eq.f32.partialorder %v1511, inf
        %v1704 = vsel %vm1703, %v1511, %v1702
        %vm1705 = vcmp.eq.f32.partialorder %v1511, 0.0
        %v1706 = vand.u32 %v1511, 2147483648
        %v1707 = vsel %vm1705, %v1706, %v1704
        %v1708 = vrsqrt.pop %v1524
        %v1709 = vmul.f32 %v1524, %v1708
        %vm1710 = vcmp.eq.f32.partialorder %v1524, inf
        %v1711 = vsel %vm1710, %v1524, %v1709
        %vm1712 = vcmp.eq.f32.partialorder %v1524, 0.0
        %v1713 = vand.u32 %v1524, 2147483648
        %v1714 = vsel %vm1712, %v1713, %v1711
        %v1715 = vrsqrt.pop %v1537
        %v1716 = vmul.f32 %v1537, %v1715
        %vm1717 = vcmp.eq.f32.partialorder %v1537, inf
        %v1718 = vsel %vm1717, %v1537, %v1716
        %vm1719 = vcmp.eq.f32.partialorder %v1537, 0.0
        %v1720 = vand.u32 %v1537, 2147483648
        %v1721 = vsel %vm1719, %v1720, %v1718
        %v1722 = vrsqrt.pop %v1550
        %v1723 = vmul.f32 %v1550, %v1722
        %vm1724 = vcmp.eq.f32.partialorder %v1550, inf
        %v1725 = vsel %vm1724, %v1550, %v1723
        %vm1726 = vcmp.eq.f32.partialorder %v1550, 0.0
        %v1727 = vand.u32 %v1550, 2147483648
        %v1728 = vsel %vm1726, %v1727, %v1725
        %v1729 = vrsqrt.pop %v1563
        %v1730 = vmul.f32 %v1563, %v1729
        %vm1731 = vcmp.eq.f32.partialorder %v1563, inf
        %v1732 = vsel %vm1731, %v1563, %v1730
        %vm1733 = vcmp.eq.f32.partialorder %v1563, 0.0
        %v1734 = vand.u32 %v1563, 2147483648
        %v1735 = vsel %vm1733, %v1734, %v1732
        %v1736 = vrsqrt.pop %v1576
        %v1737 = vmul.f32 %v1576, %v1736
        %vm1738 = vcmp.eq.f32.partialorder %v1576, inf
        %v1739 = vsel %vm1738, %v1576, %v1737
        %vm1740 = vcmp.eq.f32.partialorder %v1576, 0.0
        %v1741 = vand.u32 %v1576, 2147483648
        %v1742 = vsel %vm1740, %v1741, %v1739
        %v1743 = vrsqrt.pop %v1589
        %v1744 = vmul.f32 %v1589, %v1743
        %vm1745 = vcmp.eq.f32.partialorder %v1589, inf
        %v1746 = vsel %vm1745, %v1589, %v1744
        %vm1747 = vcmp.eq.f32.partialorder %v1589, 0.0
        %v1748 = vand.u32 %v1589, 2147483648
        %v1749 = vsel %vm1747, %v1748, %v1746
        %v1750 = vrsqrt.pop %v1602
        %v1751 = vmul.f32 %v1602, %v1750
        %vm1752 = vcmp.eq.f32.partialorder %v1602, inf
        %v1753 = vsel %vm1752, %v1602, %v1751
        %vm1754 = vcmp.eq.f32.partialorder %v1602, 0.0
        %v1755 = vand.u32 %v1602, 2147483648
        %v1756 = vsel %vm1754, %v1755, %v1753
        %v1757 = vrsqrt.pop %v1615
        %v1758 = vmul.f32 %v1615, %v1757
        %vm1759 = vcmp.eq.f32.partialorder %v1615, inf
        %v1760 = vsel %vm1759, %v1615, %v1758
        %vm1761 = vcmp.eq.f32.partialorder %v1615, 0.0
        %v1762 = vand.u32 %v1615, 2147483648
        %v1763 = vsel %vm1761, %v1762, %v1760
        %v1764 = vrsqrt.pop %v1628
        %v1765 = vmul.f32 %v1628, %v1764
        %vm1766 = vcmp.eq.f32.partialorder %v1628, inf
        %v1767 = vsel %vm1766, %v1628, %v1765
        %vm1768 = vcmp.eq.f32.partialorder %v1628, 0.0
        %v1769 = vand.u32 %v1628, 2147483648
        %v1770 = vsel %vm1768, %v1769, %v1767
        %v1771 = vrsqrt.pop %v1641
        %v1772 = vmul.f32 %v1641, %v1771
        %vm1773 = vcmp.eq.f32.partialorder %v1641, inf
        %v1774 = vsel %vm1773, %v1641, %v1772
        %vm1775 = vcmp.eq.f32.partialorder %v1641, 0.0
        %v1776 = vand.u32 %v1641, 2147483648
        %v1777 = vsel %vm1775, %v1776, %v1774
        %v1778 = vrsqrt.pop %v1654
        %v1779 = vmul.f32 %v1654, %v1778
        %vm1780 = vcmp.eq.f32.partialorder %v1654, inf
        %v1781 = vsel %vm1780, %v1654, %v1779
        %vm1782 = vcmp.eq.f32.partialorder %v1654, 0.0
        %v1783 = vand.u32 %v1654, 2147483648
        %v1784 = vsel %vm1782, %v1783, %v1781
        %v1785 = vrsqrt.pop %v1667
        %v1786 = vmul.f32 %v1667, %v1785
        %vm1787 = vcmp.eq.f32.partialorder %v1667, inf
        %v1788 = vsel %vm1787, %v1667, %v1786
        %vm1789 = vcmp.eq.f32.partialorder %v1667, 0.0
        %v1790 = vand.u32 %v1667, 2147483648
        %v1791 = vsel %vm1789, %v1790, %v1788
        %v1792 = vrsqrt.pop %v1680
        %v1793 = vmul.f32 %v1680, %v1792
        %vm1794 = vcmp.eq.f32.partialorder %v1680, inf
        %v1795 = vsel %vm1794, %v1680, %v1793
        %vm1796 = vcmp.eq.f32.partialorder %v1680, 0.0
        %v1797 = vand.u32 %v1680, 2147483648
        %v1798 = vsel %vm1796, %v1797, %v1795
        %v1799 = vrsqrt.pop %v1693
        %v1800 = vmul.f32 %v1693, %v1799
        %vm1801 = vcmp.eq.f32.partialorder %v1693, inf
        %v1802 = vsel %vm1801, %v1693, %v1800
        %vm1803 = vcmp.eq.f32.partialorder %v1693, 0.0
        %v1804 = vand.u32 %v1693, 2147483648
        %v1805 = vsel %vm1803, %v1804, %v1802
        %v1806 = vsub.f32 %v1252, %v1700
        %v1807 = vsub.f32 %v1259, %v1707
        %v1808 = vsub.f32 %v1266, %v1714
        %v1809 = vsub.f32 %v1273, %v1721
        %v1810 = vsub.f32 %v1280, %v1728
        %v1811 = vsub.f32 %v1287, %v1735
        %v1812 = vsub.f32 %v1294, %v1742
        %v1813 = vsub.f32 %v1301, %v1749
        %v1814 = vsub.f32 %v1308, %v1756
        %v1815 = vsub.f32 %v1315, %v1763
        %v1816 = vsub.f32 %v1322, %v1770
        %v1817 = vsub.f32 %v1329, %v1777
        %v1818 = vsub.f32 %v1336, %v1784
        %v1819 = vsub.f32 %v1343, %v1791
        %v1820 = vsub.f32 %v1350, %v1798
        %v1821 = vsub.f32 %v1357, %v1805
        %v1822 = vadd.f32 %v1806, 0.5
        %v1823 = vadd.f32 %v1807, 0.5
        %v1824 = vadd.f32 %v1808, 0.5
        %v1825 = vadd.f32 %v1809, 0.5
        %v1826 = vadd.f32 %v1810, 0.5
        %v1827 = vadd.f32 %v1811, 0.5
        %v1828 = vadd.f32 %v1812, 0.5
        %v1829 = vadd.f32 %v1813, 0.5
        %v1830 = vadd.f32 %v1814, 0.5
        %v1831 = vadd.f32 %v1815, 0.5
        %v1832 = vadd.f32 %v1816, 0.5
        %v1833 = vadd.f32 %v1817, 0.5
        %v1834 = vadd.f32 %v1818, 0.5
        %v1835 = vadd.f32 %v1819, 0.5
        %v1836 = vadd.f32 %v1820, 0.5
        %v1837 = vadd.f32 %v1821, 0.5
        %v1838 = vmax.f32 %v1822, 0.0
        %v1839 = vmax.f32 %v1823, 0.0
        %v1840 = vmax.f32 %v1824, 0.0
        %v1841 = vmax.f32 %v1825, 0.0
        %v1842 = vmax.f32 %v1826, 0.0
        %v1843 = vmax.f32 %v1827, 0.0
        %v1844 = vmax.f32 %v1828, 0.0
        %v1845 = vmax.f32 %v1829, 0.0
        %v1846 = vmax.f32 %v1830, 0.0
        %v1847 = vmax.f32 %v1831, 0.0
        %v1848 = vmax.f32 %v1832, 0.0
        %v1849 = vmax.f32 %v1833, 0.0
        %v1850 = vmax.f32 %v1834, 0.0
        %v1851 = vmax.f32 %v1835, 0.0
        %v1852 = vmax.f32 %v1836, 0.0
        %v1853 = vmax.f32 %v1837, 0.0
        %vm1854 = vcmask 1040384
        %v1855 = vsel %vm1854, %v1838, %v1252
        %v1856 = vsel %vm1854, %v1839, %v1259
        %v1857 = vsel %vm1854, %v1840, %v1266
        %v1858 = vsel %vm1854, %v1841, %v1273
        %v1859 = vsel %vm1854, %v1842, %v1280
        %v1860 = vsel %vm1854, %v1843, %v1287
        %v1861 = vsel %vm1854, %v1844, %v1294
        %v1862 = vsel %vm1854, %v1845, %v1301
        %v1863 = vsel %vm1854, %v1846, %v1308
        %v1864 = vsel %vm1854, %v1847, %v1315
        %v1865 = vsel %vm1854, %v1848, %v1322
        %v1866 = vsel %vm1854, %v1849, %v1329
        %v1867 = vsel %vm1854, %v1850, %v1336
        %v1868 = vsel %vm1854, %v1851, %v1343
        %v1869 = vsel %vm1854, %v1852, %v1350
        %v1870 = vsel %vm1854, %v1853, %v1357
        %vm1871 = vcmask 1041408
        %v1872 = vsel %vm1871, %v1855, %v1700
        %v1873 = vsel %vm1871, %v1856, %v1707
        %v1874 = vsel %vm1871, %v1857, %v1714
        %v1875 = vsel %vm1871, %v1858, %v1721
        %v1876 = vsel %vm1871, %v1859, %v1728
        %v1877 = vsel %vm1871, %v1860, %v1735
        %v1878 = vsel %vm1871, %v1861, %v1742
        %v1879 = vsel %vm1871, %v1862, %v1749
        %v1880 = vsel %vm1871, %v1863, %v1756
        %v1881 = vsel %vm1871, %v1864, %v1763
        %v1882 = vsel %vm1871, %v1865, %v1770
        %v1883 = vsel %vm1871, %v1866, %v1777
        %v1884 = vsel %vm1871, %v1867, %v1784
        %v1885 = vsel %vm1871, %v1868, %v1791
        %v1886 = vsel %vm1871, %v1869, %v1798
        %v1887 = vsel %vm1871, %v1870, %v1805
        %v1904 = vcombine.low %v1872, %v1873
        %v1905 = vcombine.low %v1874, %v1875
        %v1906 = vcombine.low %v1876, %v1877
        %v1907 = vcombine.low %v1878, %v1879
        %v1908 = vcombine.low %v1880, %v1881
        %v1909 = vcombine.low %v1882, %v1883
        %v1910 = vcombine.low %v1884, %v1885
        %v1911 = vcombine.low %v1886, %v1887
        %1920 = vst [vmem:[%s265] sm:$0x77] %v1904
        %1921 = vst [vmem:[%s265 + $0x8] sm:$0x77] %v1905
        %1922 = vst [vmem:[%s265 + $0x10] sm:$0x77] %v1906
        %1923 = vst [vmem:[%s265 + $0x18] sm:$0x77] %v1907
        %1924 = vst [vmem:[%s265 + $0x20] sm:$0x77] %v1908
        %1925 = vst [vmem:[%s265 + $0x28] sm:$0x77] %v1909
        %1926 = vst [vmem:[%s265 + $0x30] sm:$0x77] %v1910
        %1927 = vst [vmem:[%s265 + $0x38] sm:$0x77] %v1911
        %s1928 = sand.u32 %s109, 1
        %s1929 = scalar_lea.sflag [#allocation4], %s1928
        %s1930 = sand.u32 %s109, 1
        %s1931 = smul.addr %s1930, 64
        %s1932 = scalar_lea.vmem [#allocation8], %s1931
        // Predicated region
        $region45: #{tpu_custom_call.1} parent=31 // pred_check
          %p1933 = pneg %p119
        $region46: #{tpu_custom_call.1} parent=31 // pred_check_branch
          %1935 = sbr.rel (%p1933) target = $region48
        $region47: #{tpu_custom_call.1} parent=31 // pred_region
          %s1936 = smul.u32 16, %s23
          %s1938 = ssub.s32 1024, 1024
          %1939 = vsyncadd %s1929, %s1938
          %s1940 = smul.addr %s1936, 64
          %s1941 = scalar_lea.hbm %s3, %s1940
          %s1943 = sshll.u32 %s1932, 4
          %s1944 = int_to_ptr.vmem [resolvable:$true] %s1943
          %1946 = dma.vmem_to_hbm [thread:$0]  %s1944, 1024, %s1941, %s1929
        $region48: #{tpu_custom_call.1} parent=31 // pred_fallthru
          _
      $region32: #{tpu_custom_call.1} parent=5 // pred_fallthru
        _
      %p1947 = scmp.le.s32.totalorder 2, %s18
      // Predicated region
      $region49: #{tpu_custom_call.1} parent=5 // pred_check
        %p1948 = pneg %p1947
      $region50: #{tpu_custom_call.1} parent=5 // pred_check_branch
        %1950 = sbr.rel (%p1948) target = $region52
      $region51: #{tpu_custom_call.1} parent=5 // pred_region
        %s1951 = ssub.s32 %s18, 2
        // Predicated region
        $region53: #{tpu_custom_call.1} parent=51 // pred_check
          %p1952 = pneg %p125
        $region54: #{tpu_custom_call.1} parent=51 // pred_check_branch
          %1954 = sbr.rel (%p1952) target = $region56
        $region55: #{tpu_custom_call.1} parent=51 // pred_region
          %s1955 = sand.u32 %s110, 1
          %s1956 = scalar_lea.sflag [#allocation4], %s1955
          %s1957 = sand.u32 %s110, 1
          %s1958 = smul.addr %s1957, 64
          %s1959 = scalar_lea.vmem [#allocation8], %s1958
          %1960 = dma.done %s1956, 1024
        $region56: #{tpu_custom_call.1} parent=51 // pred_fallthru
          _
      $region52: #{tpu_custom_call.1} parent=5 // pred_fallthru
        _
    $region6: #{tpu_custom_call.1} parent=1 // loop_footer
      %s22 = sadd.s32 1, %s18
    $region7: #{tpu_custom_call.1} parent=1 // loop_footer_branch
      %17 = sbr.rel target = $region3
    $region8: #{tpu_custom_call.1} parent=1 // loop_exit
      _
    %1961 = vsyncpa [#allocation3], 1
    %s1962 = scalar_lea.sflag [#allocation3], 1
    %1963 = vsyncpa %s1962, 1
    %1964 = vsyncpa [#allocation6], 1
    %s1965 = scalar_lea.sflag [#allocation6], 1
    %1966 = vsyncpa %s1965, 1
    %1967 = vsyncpa [#allocation4], 1
    %s1968 = scalar_lea.sflag [#allocation4], 1
    %1969 = vsyncpa %s1968, 1

</llo_original>
